<compile_context>
chip_gen: v6e
topology: v6e:2x2x1
jax: 0.10.0
libtpu: 0.0.40
codegen_flags: <defaults>
</compile_context>

<pallas_src>
import jax
import jax.numpy as jnp
import numpy as np
from jax import lax
from jax.experimental import pallas as pl
from jax.experimental.pallas import tpu as pltpu

# ----------------------------- model constants -----------------------------
NCH = 4                           # total input channels (last feeds handcrafted)
CIN, COUT, KH, KW = 3, 32, 3, 3
H, W = 9, 9
OH, OW = H - KH + 1, W - KW + 1   # 7, 7
ROWK = W * NCH                    # 36   = per-row (w, c) contraction width
KDIM = KH * ROWK                  # 108  = conv contraction width (kh, w, c)
ROWN = OW * COUT                  # 224  = conv output width (ow, cout)
FLAT = COUT * OH * OW             # 1568
FC1_OUT = 128
FC2_IN, FC2_OUT = 134, 64
FC3_OUT = 6
N_HAND = 6
OUT_PAD = 8                       # lane-padded fc3 output width (sliced to 6 outside)
TBATCH = 512                      # max batch tile (multiple of 8)


# ------------------------------- fused kernel -------------------------------
def fused_kernel(x3_ref, hand_ref, wband_ref, bconv_ref, w1b_ref, b1_ref,
                 w2a_ref, w2b_ref, b2_ref, w3_ref, b3_ref, out_ref):
    # x3_ref:   (OH, TB, 108)   kh-stacked image rows, lanes = (kh, w, c)
    # wband_ref:(108, 224)      banded conv weight (zero rows for c == 3)
    # w1b_ref:  (OH, 224, 128)  fc1 weight in the conv's natural layout
    n_oh, tb, kdim = x3_ref.shape

    # conv1 + bias + relu: ONE matmul with M = OH*TB, K = 108, N = 224.
    # The leading-dim merge is layout-identical because tb % 8 == 0.
    x3 = x3_ref[...].reshape(n_oh * tb, kdim)
    conv = jnp.dot(x3, wband_ref[...], preferred_element_type=jnp.float32)
    conv = jnp.maximum(conv + bconv_ref[...], 0.0)              # (OH*TB, 224) f32
    conv = conv.astype(w1b_ref.dtype).reshape(n_oh, tb, ROWN)   # free split

    # fc1 + relu: accumulate across oh (no (OH, TB, 128) intermediate).
    w1b = w1b_ref[...]
    h1 = None
    for h in range(n_oh):
        p = jnp.dot(conv[h], w1b[h], preferred_element_type=jnp.float32)
        h1 = p if h1 is None else h1 + p
    h1 = jnp.maximum(h1 + b1_ref[...], 0.0)                     # (TB, 128) f32

    # fc2 on cat([h1, hand]) == h1 @ w2a + hand @ w2b (column-split weight);
    # the K=6 hand part runs on the VPU as 6 broadcast-FMAs instead of the MXU.
    h2 = (jnp.dot(h1.astype(w2a_ref.dtype), w2a_ref[...],
                  preferred_element_type=jnp.float32) + b2_ref[...])
    hand = hand_ref[...]                                        # (TB, 6) f32
    w2b = w2b_ref[...]                                          # (6, 64) f32
    for c in range(N_HAND):
        h2 = h2 + hand[:, c:c + 1] * w2b[c:c + 1, :]
    h2 = jnp.maximum(h2, 0.0)                                   # (TB, 64)

    # fc3 (lane-padded to 8; padded columns carry zero weights / zero bias)
    out_ref[...] = (jnp.dot(h2, w3_ref[...], preferred_element_type=jnp.float32)
                    + b3_ref[...])                              # (TB, 8)


# --------------------------- one-time weight prep ---------------------------
def prepare_params(params, compute_dtype=jnp.float32):
    """Reorder / pad all weights once, outside the per-call forward.

    compute_dtype: dtype of the MXU operands (wband / w1b / w2a and, inside the
    kernel, the conv / h1 activations). f32 gives exact parity; bf16 roughly
    3-4x MXU throughput with f32 accumulation.
    """
    wc = np.asarray(params["wc"], np.float32)       # (32, 3, 3, 3)
    bc = np.asarray(params["bc"], np.float32)       # (32,)
    w1 = np.asarray(params["w1"], np.float32)       # (128, 1568)
    b1 = np.asarray(params["b1"], np.float32)       # (128,)
    w2 = np.asarray(params["w2"], np.float32)       # (64, 134)
    b2 = np.asarray(params["b2"], np.float32)       # (64,)
    w3 = np.asarray(params["w3"], np.float32)       # (6, 64)
    b3 = np.asarray(params["b3"], np.float32)       # (6,)

    # Banded conv weight with kh folded into the contraction:
    #   band[kh*36 + w*NCH + c, ow*COUT + co] = wc[co, c, kh, w - ow]
    # Rows for channel c == 3 stay zero -> the handcrafted plane never contributes.
    band = np.zeros((KDIM, ROWN), np.float32)
    for kh in range(KH):
        for ow in range(OW):
            for kw in range(KW):
                w = ow + kw
                for c in range(CIN):
                    band[kh * ROWK + w * NCH + c,
                         ow * COUT:(ow + 1) * COUT] = wc[:, c, kh, kw]

    bconv = np.tile(bc, OW).reshape(1, ROWN)         # conv bias tiled over ow

    # fc1 weight reordered to the kernel's conv layout (oh, (ow, cout)) -- this
    # absorbs PyTorch's channel-major flatten so activations are never transposed.
    w1b = (w1.reshape(FC1_OUT, COUT, OH, OW)
             .transpose(2, 3, 1, 0)
             .reshape(OH, ROWN, FC1_OUT))

    w2a = w2[:, :FC1_OUT].T.copy()                   # (128, 64)
    w2b = w2[:, FC1_OUT:].T.copy()                   # (6, 64)  (VPU path, keep f32)

    w3p = np.zeros((FC2_OUT, OUT_PAD), np.float32)
    w3p[:, :FC3_OUT] = w3.T
    b3p = np.zeros((1, OUT_PAD), np.float32)
    b3p[0, :FC3_OUT] = b3

    return {
        "wband": jnp.asarray(band, compute_dtype),
        "bconv": jnp.asarray(bconv),
        "w1b": jnp.asarray(w1b, compute_dtype),
        "b1": jnp.asarray(b1.reshape(1, FC1_OUT)),
        "w2a": jnp.asarray(w2a, compute_dtype),
        "w2b": jnp.asarray(w2b),
        "b2": jnp.asarray(b2.reshape(1, FC2_OUT)),
        "w3p": jnp.asarray(w3p),
        "b3p": jnp.asarray(b3p),
    }


# ------------------------------ batch tiling --------------------------------
def _round_up(n, m):
    return ((n + m - 1) // m) * m


def _batch_tiling(batch):
    """Return (tile, padded_batch, num_tiles); tile is always a multiple of 8."""
    if batch < 32:                              # tiny-batch latency path: 1 tile
        tb = _round_up(batch, 8)
        return tb, tb, 1
    # >= 2 grid steps so both v7x TensorCores get work; cap the tile at TBATCH.
    n = max(2, _round_up(batch, TBATCH) // TBATCH)
    tb = _round_up(-(-batch // n), 8)
    return tb, n * tb, n


# ------------------------------- forward pass -------------------------------
@jax.jit
def network_forward(x, prep):
    """x: (B, 4, 9, 9) float32 NCHW."""
    B = x.shape[0]
    hand = x[:, CIN, 0, :N_HAND].astype(jnp.float32)            # (B, 6)

    # x2[h, b, w*4 + c] = x[b, c, h, w]; x3 stacks the three kh-shifted rows.
    # TODO(synk): for the very small-B latency path these wrapper layout ops
    # (transpose/concat/pad/slice) are separate XLA fusions around the single
    # fused pallas_call; fold them in-kernel only if an xprof trace shows them
    # dominating.
    x2 = jnp.transpose(x, (2, 0, 3, 1)).reshape(H, B, ROWK)      # (9, B, 36)
    x3 = jnp.concatenate([x2[0:OH], x2[1:1 + OH], x2[2:2 + OH]],
                         axis=-1)                                # (7, B, 108)
    x3 = x3.astype(prep["wband"].dtype)

    tb, bp, ntiles = _batch_tiling(B)
    if bp != B:
        x3 = jnp.pad(x3, ((0, 0), (0, bp - B), (0, 0)))
        hand = jnp.pad(hand, ((0, bp - B), (0, 0)))

    out = pl.pallas_call(
        fused_kernel,
        out_shape=jax.ShapeDtypeStruct((bp, OUT_PAD), jnp.float32),
        grid=(ntiles,),
        in_specs=[
            pl.BlockSpec((OH, tb, KDIM), lambda i: (0, i, 0)),          # x3
            pl.BlockSpec((tb, N_HAND), lambda i: (i, 0)),               # hand
            pl.BlockSpec((KDIM, ROWN), lambda i: (0, 0)),               # wband (resident)
            pl.BlockSpec((1, ROWN), lambda i: (0, 0)),                  # bconv
            pl.BlockSpec((OH, ROWN, FC1_OUT), lambda i: (0, 0, 0)),     # w1b
            pl.BlockSpec((1, FC1_OUT), lambda i: (0, 0)),               # b1
            pl.BlockSpec((FC1_OUT, FC2_OUT), lambda i: (0, 0)),         # w2a
            pl.BlockSpec((N_HAND, FC2_OUT), lambda i: (0, 0)),          # w2b
            pl.BlockSpec((1, FC2_OUT), lambda i: (0, 0)),               # b2
            pl.BlockSpec((FC2_OUT, OUT_PAD), lambda i: (0, 0)),         # w3 (padded)
            pl.BlockSpec((1, OUT_PAD), lambda i: (0, 0)),               # b3 (padded)
        ],
        out_specs=pl.BlockSpec((tb, OUT_PAD), lambda i: (i, 0)),
        compiler_params=pltpu.CompilerParams(
            dimension_semantics=("parallel",),
            vmem_limit_bytes=32 * 1024 * 1024),
    )(x3, hand, prep["wband"], prep["bconv"], prep["w1b"], prep["b1"],
      prep["w2a"], prep["w2b"], prep["b2"], prep["w3p"], prep["b3p"])

    return out[:B, :FC3_OUT]


# ----------------------------- pure-JAX reference ----------------------------
def reference_forward(x, params):
    hand = x[:, -1, 0, :N_HAND]
    conv = lax.conv_general_dilated(
        x[:, :CIN], params["wc"], window_strides=(1, 1), padding="VALID",
        dimension_numbers=("NCHW", "OIHW", "NCHW"))
    conv = jnp.maximum(conv + params["bc"][None, :, None, None], 0.0)
    h = conv.reshape(x.shape[0], -1)
    h = jnp.maximum(h @ params["w1"].T + params["b1"], 0.0)
    h = jnp.concatenate([h, hand], axis=1)
    h = jnp.maximum(h @ params["w2"].T + params["b2"], 0.0)
    return h @ params["w3"].T + params["b3"]


# ----------------------------------- main ------------------------------------
def init_params(key):
    ks = jax.random.split(key, 8)
    s = 0.05
    return {
        "wc": s * jax.random.normal(ks[0], (COUT, CIN, KH, KW), jnp.float32),
        "bc": s * jax.random.normal(ks[1], (COUT,), jnp.float32),
        "w1": s * jax.random.normal(ks[2], (FC1_OUT, FLAT), jnp.float32),
        "b1": s * jax.random.normal(ks[3], (FC1_OUT,), jnp.float32),
        "w2": s * jax.random.normal(ks[4], (FC2_OUT, FC2_IN), jnp.float32),
        "b2": s * jax.random.normal(ks[5], (FC2_OUT,), jnp.float32),
        "w3": s * jax.random.normal(ks[6], (FC3_OUT, FC2_OUT), jnp.float32),
        "b3": s * jax.random.normal(ks[7], (FC3_OUT,), jnp.float32),
    }


if __name__ == "__main__":
    key = jax.random.PRNGKey(0)
    k_x, k_x2, k_p = jax.random.split(key, 3)
    params = init_params(k_p)

    # ---- f32 path, tiny batch (latency path, single grid step) ----
    prep_f32 = prepare_params(params, jnp.float32)
    x_small = jax.random.normal(k_x, (2, NCH, H, W), jnp.float32)   # (2, 4, 9, 9)
    out_small = jax.block_until_ready(network_forward(x_small, prep_f32))
    ref_small = reference_forward(x_small, params)
    np.testing.assert_allclose(np.asarray(out_small), np.asarray(ref_small),
                               rtol=1e-3, atol=1e-3)
    assert out_small.shape == (2, FC3_OUT)

    # ---- f32 path, medium batch (2 grid steps + batch padding) ----
    x_med = jax.random.normal(k_x2, (100, NCH, H, W), jnp.float32)
    out_med = jax.block_until_ready(network_forward(x_med, prep_f32))
    ref_med = reference_forward(x_med, params)
    np.testing.assert_allclose(np.asarray(out_med), np.asarray(ref_med),
                               rtol=1e-3, atol=1e-3)

    # ---- bf16 MXU-operand path (f32 accumulation), looser parity ----
    prep_bf16 = prepare_params(params, jnp.bfloat16)
    out_bf16 = jax.block_until_ready(network_forward(x_small, prep_bf16))
    np.testing.assert_allclose(np.asarray(out_bf16), np.asarray(ref_small),
                               rtol=5e-2, atol=5e-2)

    print("KERNEL_OK")
</pallas_src>

<mosaic_0001>
module attributes {stable_mosaic.version = 11 : i64} {
  func.func @fused_kernel(%arg0: i32, %arg1: memref<7x8x108xf32, #tpu.memory_space<vmem>>, %arg2: memref<8x6xf32, #tpu.memory_space<vmem>>, %arg3: memref<108x224xf32, #tpu.memory_space<vmem>>, %arg4: memref<1x224xf32, #tpu.memory_space<vmem>>, %arg5: memref<7x224x128xf32, #tpu.memory_space<vmem>>, %arg6: memref<1x128xf32, #tpu.memory_space<vmem>>, %arg7: memref<128x64xf32, #tpu.memory_space<vmem>>, %arg8: memref<6x64xf32, #tpu.memory_space<vmem>>, %arg9: memref<1x64xf32, #tpu.memory_space<vmem>>, %arg10: memref<64x8xf32, #tpu.memory_space<vmem>>, %arg11: memref<1x8xf32, #tpu.memory_space<vmem>>, %arg12: memref<8x8xf32, #tpu.memory_space<vmem>>) attributes {dimension_semantics = [#tpu.dimension_semantics<parallel>], iteration_bounds = array<i64: 1>, scalar_prefetch = 0 : i64, scratch_operands = 0 : i64, tpu.core_type = #tpu.core_type<tc>, window_params = [{transform_indices = @transform_0, window_bounds = array<i64: 7, 8, 108>}, {transform_indices = @transform_1, window_bounds = array<i64: 8, 6>}, {pipeline_mode = #tpu.pipeline_mode<synchronous>, transform_indices = @transform_2, window_bounds = array<i64: 108, 224>}, {pipeline_mode = #tpu.pipeline_mode<synchronous>, transform_indices = @transform_3, window_bounds = array<i64: 1, 224>}, {pipeline_mode = #tpu.pipeline_mode<synchronous>, transform_indices = @transform_4, window_bounds = array<i64: 7, 224, 128>}, {pipeline_mode = #tpu.pipeline_mode<synchronous>, transform_indices = @transform_5, window_bounds = array<i64: 1, 128>}, {pipeline_mode = #tpu.pipeline_mode<synchronous>, transform_indices = @transform_6, window_bounds = array<i64: 128, 64>}, {pipeline_mode = #tpu.pipeline_mode<synchronous>, transform_indices = @transform_7, window_bounds = array<i64: 6, 64>}, {pipeline_mode = #tpu.pipeline_mode<synchronous>, transform_indices = @transform_8, window_bounds = array<i64: 1, 64>}, {pipeline_mode = #tpu.pipeline_mode<synchronous>, transform_indices = @transform_9, window_bounds = array<i64: 64, 8>}, {pipeline_mode = #tpu.pipeline_mode<synchronous>, transform_indices = @transform_10, window_bounds = array<i64: 1, 8>}, {transform_indices = @transform_11, window_bounds = array<i64: 8, 8>}]} {
    %c0 = arith.constant 0 : index
    %c0_0 = arith.constant 0 : index
    %c0_1 = arith.constant 0 : index
    %0 = vector.load %arg1[%c0, %c0_0, %c0_1] : memref<7x8x108xf32, #tpu.memory_space<vmem>>, vector<7x8x108xf32>
    %1 = vector.shape_cast %0 : vector<7x8x108xf32> to vector<56x108xf32>
    %c0_2 = arith.constant 0 : index
    %c0_3 = arith.constant 0 : index
    %2 = vector.load %arg3[%c0_2, %c0_3] : memref<108x224xf32, #tpu.memory_space<vmem>>, vector<108x224xf32>
    %cst = arith.constant dense<0.000000e+00> : vector<56x224xf32>
    %3 = tpu.matmul %1, %2, %cst {dimension_numbers = #tpu.dot_dimension_numbers<[1], [0], [0], [1], [0, 0, 1, 1], [], []>} : vector<56x108xf32>, vector<108x224xf32>, vector<56x224xf32> -> vector<56x224xf32>
    %c0_4 = arith.constant 0 : index
    %c0_5 = arith.constant 0 : index
    %4 = vector.load %arg4[%c0_4, %c0_5] : memref<1x224xf32, #tpu.memory_space<vmem>>, vector<1x224xf32>
    %5 = vector.broadcast %4 : vector<1x224xf32> to vector<56x224xf32>
    %6 = arith.addf %3, %5 : vector<56x224xf32>
    %cst_6 = arith.constant 0.000000e+00 : f32
    %7 = vector.broadcast %cst_6 : f32 to vector<56x224xf32>
    %8 = arith.maximumf %6, %7 : vector<56x224xf32>
    %9 = vector.shape_cast %8 : vector<56x224xf32> to vector<7x8x224xf32>
    %c0_7 = arith.constant 0 : index
    %c0_8 = arith.constant 0 : index
    %c0_9 = arith.constant 0 : index
    %10 = vector.load %arg5[%c0_7, %c0_8, %c0_9] : memref<7x224x128xf32, #tpu.memory_space<vmem>>, vector<7x224x128xf32>
    %11 = vector.extract_strided_slice %9 {offsets = [0, 0, 0], sizes = [1, 8, 224], strides = [1, 1, 1]} : vector<7x8x224xf32> to vector<1x8x224xf32>
    %12 = vector.shape_cast %11 : vector<1x8x224xf32> to vector<8x224xf32>
    %13 = vector.extract_strided_slice %10 {offsets = [0, 0, 0], sizes = [1, 224, 128], strides = [1, 1, 1]} : vector<7x224x128xf32> to vector<1x224x128xf32>
    %14 = vector.shape_cast %13 : vector<1x224x128xf32> to vector<224x128xf32>
    %cst_10 = arith.constant dense<0.000000e+00> : vector<8x128xf32>
    %15 = tpu.matmul %12, %14, %cst_10 {dimension_numbers = #tpu.dot_dimension_numbers<[1], [0], [0], [1], [0, 0, 1, 1], [], []>} : vector<8x224xf32>, vector<224x128xf32>, vector<8x128xf32> -> vector<8x128xf32>
    %16 = vector.extract_strided_slice %9 {offsets = [1, 0, 0], sizes = [1, 8, 224], strides = [1, 1, 1]} : vector<7x8x224xf32> to vector<1x8x224xf32>
    %17 = vector.shape_cast %16 : vector<1x8x224xf32> to vector<8x224xf32>
    %18 = vector.extract_strided_slice %10 {offsets = [1, 0, 0], sizes = [1, 224, 128], strides = [1, 1, 1]} : vector<7x224x128xf32> to vector<1x224x128xf32>
    %19 = vector.shape_cast %18 : vector<1x224x128xf32> to vector<224x128xf32>
    %cst_11 = arith.constant dense<0.000000e+00> : vector<8x128xf32>
    %20 = tpu.matmul %17, %19, %cst_11 {dimension_numbers = #tpu.dot_dimension_numbers<[1], [0], [0], [1], [0, 0, 1, 1], [], []>} : vector<8x224xf32>, vector<224x128xf32>, vector<8x128xf32> -> vector<8x128xf32>
    %21 = arith.addf %15, %20 : vector<8x128xf32>
    %22 = vector.extract_strided_slice %9 {offsets = [2, 0, 0], sizes = [1, 8, 224], strides = [1, 1, 1]} : vector<7x8x224xf32> to vector<1x8x224xf32>
    %23 = vector.shape_cast %22 : vector<1x8x224xf32> to vector<8x224xf32>
    %24 = vector.extract_strided_slice %10 {offsets = [2, 0, 0], sizes = [1, 224, 128], strides = [1, 1, 1]} : vector<7x224x128xf32> to vector<1x224x128xf32>
    %25 = vector.shape_cast %24 : vector<1x224x128xf32> to vector<224x128xf32>
    %cst_12 = arith.constant dense<0.000000e+00> : vector<8x128xf32>
    %26 = tpu.matmul %23, %25, %cst_12 {dimension_numbers = #tpu.dot_dimension_numbers<[1], [0], [0], [1], [0, 0, 1, 1], [], []>} : vector<8x224xf32>, vector<224x128xf32>, vector<8x128xf32> -> vector<8x128xf32>
    %27 = arith.addf %21, %26 : vector<8x128xf32>
    %28 = vector.extract_strided_slice %9 {offsets = [3, 0, 0], sizes = [1, 8, 224], strides = [1, 1, 1]} : vector<7x8x224xf32> to vector<1x8x224xf32>
    %29 = vector.shape_cast %28 : vector<1x8x224xf32> to vector<8x224xf32>
    %30 = vector.extract_strided_slice %10 {offsets = [3, 0, 0], sizes = [1, 224, 128], strides = [1, 1, 1]} : vector<7x224x128xf32> to vector<1x224x128xf32>
    %31 = vector.shape_cast %30 : vector<1x224x128xf32> to vector<224x128xf32>
    %cst_13 = arith.constant dense<0.000000e+00> : vector<8x128xf32>
    %32 = tpu.matmul %29, %31, %cst_13 {dimension_numbers = #tpu.dot_dimension_numbers<[1], [0], [0], [1], [0, 0, 1, 1], [], []>} : vector<8x224xf32>, vector<224x128xf32>, vector<8x128xf32> -> vector<8x128xf32>
    %33 = arith.addf %27, %32 : vector<8x128xf32>
    %34 = vector.extract_strided_slice %9 {offsets = [4, 0, 0], sizes = [1, 8, 224], strides = [1, 1, 1]} : vector<7x8x224xf32> to vector<1x8x224xf32>
    %35 = vector.shape_cast %34 : vector<1x8x224xf32> to vector<8x224xf32>
    %36 = vector.extract_strided_slice %10 {offsets = [4, 0, 0], sizes = [1, 224, 128], strides = [1, 1, 1]} : vector<7x224x128xf32> to vector<1x224x128xf32>
    %37 = vector.shape_cast %36 : vector<1x224x128xf32> to vector<224x128xf32>
    %cst_14 = arith.constant dense<0.000000e+00> : vector<8x128xf32>
    %38 = tpu.matmul %35, %37, %cst_14 {dimension_numbers = #tpu.dot_dimension_numbers<[1], [0], [0], [1], [0, 0, 1, 1], [], []>} : vector<8x224xf32>, vector<224x128xf32>, vector<8x128xf32> -> vector<8x128xf32>
    %39 = arith.addf %33, %38 : vector<8x128xf32>
    %40 = vector.extract_strided_slice %9 {offsets = [5, 0, 0], sizes = [1, 8, 224], strides = [1, 1, 1]} : vector<7x8x224xf32> to vector<1x8x224xf32>
    %41 = vector.shape_cast %40 : vector<1x8x224xf32> to vector<8x224xf32>
    %42 = vector.extract_strided_slice %10 {offsets = [5, 0, 0], sizes = [1, 224, 128], strides = [1, 1, 1]} : vector<7x224x128xf32> to vector<1x224x128xf32>
    %43 = vector.shape_cast %42 : vector<1x224x128xf32> to vector<224x128xf32>
    %cst_15 = arith.constant dense<0.000000e+00> : vector<8x128xf32>
    %44 = tpu.matmul %41, %43, %cst_15 {dimension_numbers = #tpu.dot_dimension_numbers<[1], [0], [0], [1], [0, 0, 1, 1], [], []>} : vector<8x224xf32>, vector<224x128xf32>, vector<8x128xf32> -> vector<8x128xf32>
    %45 = arith.addf %39, %44 : vector<8x128xf32>
    %46 = vector.extract_strided_slice %9 {offsets = [6, 0, 0], sizes = [1, 8, 224], strides = [1, 1, 1]} : vector<7x8x224xf32> to vector<1x8x224xf32>
    %47 = vector.shape_cast %46 : vector<1x8x224xf32> to vector<8x224xf32>
    %48 = vector.extract_strided_slice %10 {offsets = [6, 0, 0], sizes = [1, 224, 128], strides = [1, 1, 1]} : vector<7x224x128xf32> to vector<1x224x128xf32>
    %49 = vector.shape_cast %48 : vector<1x224x128xf32> to vector<224x128xf32>
    %cst_16 = arith.constant dense<0.000000e+00> : vector<8x128xf32>
    %50 = tpu.matmul %47, %49, %cst_16 {dimension_numbers = #tpu.dot_dimension_numbers<[1], [0], [0], [1], [0, 0, 1, 1], [], []>} : vector<8x224xf32>, vector<224x128xf32>, vector<8x128xf32> -> vector<8x128xf32>
    %51 = arith.addf %45, %50 : vector<8x128xf32>
    %c0_17 = arith.constant 0 : index
    %c0_18 = arith.constant 0 : index
    %52 = vector.load %arg6[%c0_17, %c0_18] : memref<1x128xf32, #tpu.memory_space<vmem>>, vector<1x128xf32>
    %53 = vector.broadcast %52 : vector<1x128xf32> to vector<8x128xf32>
    %54 = arith.addf %51, %53 : vector<8x128xf32>
    %cst_19 = arith.constant 0.000000e+00 : f32
    %55 = vector.broadcast %cst_19 : f32 to vector<8x128xf32>
    %56 = arith.maximumf %54, %55 : vector<8x128xf32>
    %c0_20 = arith.constant 0 : index
    %c0_21 = arith.constant 0 : index
    %57 = vector.load %arg7[%c0_20, %c0_21] : memref<128x64xf32, #tpu.memory_space<vmem>>, vector<128x64xf32>
    %cst_22 = arith.constant dense<0.000000e+00> : vector<8x64xf32>
    %58 = tpu.matmul %56, %57, %cst_22 {dimension_numbers = #tpu.dot_dimension_numbers<[1], [0], [0], [1], [0, 0, 1, 1], [], []>} : vector<8x128xf32>, vector<128x64xf32>, vector<8x64xf32> -> vector<8x64xf32>
    %c0_23 = arith.constant 0 : index
    %c0_24 = arith.constant 0 : index
    %59 = vector.load %arg9[%c0_23, %c0_24] : memref<1x64xf32, #tpu.memory_space<vmem>>, vector<1x64xf32>
    %60 = vector.broadcast %59 : vector<1x64xf32> to vector<8x64xf32>
    %61 = arith.addf %58, %60 : vector<8x64xf32>
    %c0_25 = arith.constant 0 : index
    %c0_26 = arith.constant 0 : index
    %62 = vector.load %arg2[%c0_25, %c0_26] : memref<8x6xf32, #tpu.memory_space<vmem>>, vector<8x6xf32>
    %c0_27 = arith.constant 0 : index
    %c0_28 = arith.constant 0 : index
    %63 = vector.load %arg8[%c0_27, %c0_28] : memref<6x64xf32, #tpu.memory_space<vmem>>, vector<6x64xf32>
    %64 = vector.extract_strided_slice %62 {offsets = [0, 0], sizes = [8, 1], strides = [1, 1]} : vector<8x6xf32> to vector<8x1xf32>
    %65 = vector.extract_strided_slice %63 {offsets = [0, 0], sizes = [1, 64], strides = [1, 1]} : vector<6x64xf32> to vector<1x64xf32>
    %66 = vector.broadcast %64 : vector<8x1xf32> to vector<8x64xf32>
    %67 = vector.broadcast %65 : vector<1x64xf32> to vector<8x64xf32>
    %68 = arith.mulf %66, %67 : vector<8x64xf32>
    %69 = arith.addf %61, %68 : vector<8x64xf32>
    %70 = vector.extract_strided_slice %62 {offsets = [0, 1], sizes = [8, 1], strides = [1, 1]} : vector<8x6xf32> to vector<8x1xf32>
    %71 = vector.extract_strided_slice %63 {offsets = [1, 0], sizes = [1, 64], strides = [1, 1]} : vector<6x64xf32> to vector<1x64xf32>
    %72 = vector.broadcast %70 : vector<8x1xf32> to vector<8x64xf32>
    %73 = vector.broadcast %71 : vector<1x64xf32> to vector<8x64xf32>
    %74 = arith.mulf %72, %73 : vector<8x64xf32>
    %75 = arith.addf %69, %74 : vector<8x64xf32>
    %76 = vector.extract_strided_slice %62 {offsets = [0, 2], sizes = [8, 1], strides = [1, 1]} : vector<8x6xf32> to vector<8x1xf32>
    %77 = vector.extract_strided_slice %63 {offsets = [2, 0], sizes = [1, 64], strides = [1, 1]} : vector<6x64xf32> to vector<1x64xf32>
    %78 = vector.broadcast %76 : vector<8x1xf32> to vector<8x64xf32>
    %79 = vector.broadcast %77 : vector<1x64xf32> to vector<8x64xf32>
    %80 = arith.mulf %78, %79 : vector<8x64xf32>
    %81 = arith.addf %75, %80 : vector<8x64xf32>
    %82 = vector.extract_strided_slice %62 {offsets = [0, 3], sizes = [8, 1], strides = [1, 1]} : vector<8x6xf32> to vector<8x1xf32>
    %83 = vector.extract_strided_slice %63 {offsets = [3, 0], sizes = [1, 64], strides = [1, 1]} : vector<6x64xf32> to vector<1x64xf32>
    %84 = vector.broadcast %82 : vector<8x1xf32> to vector<8x64xf32>
    %85 = vector.broadcast %83 : vector<1x64xf32> to vector<8x64xf32>
    %86 = arith.mulf %84, %85 : vector<8x64xf32>
    %87 = arith.addf %81, %86 : vector<8x64xf32>
    %88 = vector.extract_strided_slice %62 {offsets = [0, 4], sizes = [8, 1], strides = [1, 1]} : vector<8x6xf32> to vector<8x1xf32>
    %89 = vector.extract_strided_slice %63 {offsets = [4, 0], sizes = [1, 64], strides = [1, 1]} : vector<6x64xf32> to vector<1x64xf32>
    %90 = vector.broadcast %88 : vector<8x1xf32> to vector<8x64xf32>
    %91 = vector.broadcast %89 : vector<1x64xf32> to vector<8x64xf32>
    %92 = arith.mulf %90, %91 : vector<8x64xf32>
    %93 = arith.addf %87, %92 : vector<8x64xf32>
    %94 = vector.extract_strided_slice %62 {offsets = [0, 5], sizes = [8, 1], strides = [1, 1]} : vector<8x6xf32> to vector<8x1xf32>
    %95 = vector.extract_strided_slice %63 {offsets = [5, 0], sizes = [1, 64], strides = [1, 1]} : vector<6x64xf32> to vector<1x64xf32>
    %96 = vector.broadcast %94 : vector<8x1xf32> to vector<8x64xf32>
    %97 = vector.broadcast %95 : vector<1x64xf32> to vector<8x64xf32>
    %98 = arith.mulf %96, %97 : vector<8x64xf32>
    %99 = arith.addf %93, %98 : vector<8x64xf32>
    %cst_29 = arith.constant 0.000000e+00 : f32
    %100 = vector.broadcast %cst_29 : f32 to vector<8x64xf32>
    %101 = arith.maximumf %99, %100 : vector<8x64xf32>
    %c0_30 = arith.constant 0 : index
    %c0_31 = arith.constant 0 : index
    %102 = vector.load %arg10[%c0_30, %c0_31] : memref<64x8xf32, #tpu.memory_space<vmem>>, vector<64x8xf32>
    %cst_32 = arith.constant dense<0.000000e+00> : vector<8x8xf32>
    %103 = tpu.matmul %101, %102, %cst_32 {dimension_numbers = #tpu.dot_dimension_numbers<[1], [0], [0], [1], [0, 0, 1, 1], [], []>} : vector<8x64xf32>, vector<64x8xf32>, vector<8x8xf32> -> vector<8x8xf32>
    %c0_33 = arith.constant 0 : index
    %c0_34 = arith.constant 0 : index
    %104 = vector.load %arg11[%c0_33, %c0_34] : memref<1x8xf32, #tpu.memory_space<vmem>>, vector<1x8xf32>
    %105 = vector.broadcast %104 : vector<1x8xf32> to vector<8x8xf32>
    %106 = arith.addf %103, %105 : vector<8x8xf32>
    %c0_35 = arith.constant 0 : index
    %c0_36 = arith.constant 0 : index
    %107 = vector.load %arg12[%c0_35, %c0_36] : memref<8x8xf32, #tpu.memory_space<vmem>>, vector<8x8xf32>
    tpu.vector_store %arg12[%c0_35, %c0_36], %106 {strides = array<i32>} : memref<8x8xf32, #tpu.memory_space<vmem>>, vector<8x8xf32>,
    return
  }
  func.func @transform_0(%arg0: i32) -> (i32, i32, i32) {
    %c0_i32 = arith.constant 0 : i32
    %c0_i32_0 = arith.constant 0 : i32
    %c0_i32_1 = arith.constant 0 : i32
    return %c0_i32, %arg0, %c0_i32_0 : i32, i32, i32
  }
  func.func @transform_1(%arg0: i32) -> (i32, i32) {
    %c0_i32 = arith.constant 0 : i32
    %c0_i32_0 = arith.constant 0 : i32
    return %arg0, %c0_i32 : i32, i32
  }
  func.func @transform_2(%arg0: i32) -> (i32, i32) {
    %c0_i32 = arith.constant 0 : i32
    %c0_i32_0 = arith.constant 0 : i32
    %c0_i32_1 = arith.constant 0 : i32
    return %c0_i32, %c0_i32_0 : i32, i32
  }
  func.func @transform_3(%arg0: i32) -> (i32, i32) {
    %c0_i32 = arith.constant 0 : i32
    %c0_i32_0 = arith.constant 0 : i32
    %c0_i32_1 = arith.constant 0 : i32
    return %c0_i32, %c0_i32_0 : i32, i32
  }
  func.func @transform_4(%arg0: i32) -> (i32, i32, i32) {
    %c0_i32 = arith.constant 0 : i32
    %c0_i32_0 = arith.constant 0 : i32
    %c0_i32_1 = arith.constant 0 : i32
    %c0_i32_2 = arith.constant 0 : i32
    return %c0_i32, %c0_i32_0, %c0_i32_1 : i32, i32, i32
  }
  func.func @transform_5(%arg0: i32) -> (i32, i32) {
    %c0_i32 = arith.constant 0 : i32
    %c0_i32_0 = arith.constant 0 : i32
    %c0_i32_1 = arith.constant 0 : i32
    return %c0_i32, %c0_i32_0 : i32, i32
  }
  func.func @transform_6(%arg0: i32) -> (i32, i32) {
    %c0_i32 = arith.constant 0 : i32
    %c0_i32_0 = arith.constant 0 : i32
    %c0_i32_1 = arith.constant 0 : i32
    return %c0_i32, %c0_i32_0 : i32, i32
  }
  func.func @transform_7(%arg0: i32) -> (i32, i32) {
    %c0_i32 = arith.constant 0 : i32
    %c0_i32_0 = arith.constant 0 : i32
    %c0_i32_1 = arith.constant 0 : i32
    return %c0_i32, %c0_i32_0 : i32, i32
  }
  func.func @transform_8(%arg0: i32) -> (i32, i32) {
    %c0_i32 = arith.constant 0 : i32
    %c0_i32_0 = arith.constant 0 : i32
    %c0_i32_1 = arith.constant 0 : i32
    return %c0_i32, %c0_i32_0 : i32, i32
  }
  func.func @transform_9(%arg0: i32) -> (i32, i32) {
    %c0_i32 = arith.constant 0 : i32
    %c0_i32_0 = arith.constant 0 : i32
    %c0_i32_1 = arith.constant 0 : i32
    return %c0_i32, %c0_i32_0 : i32, i32
  }
  func.func @transform_10(%arg0: i32) -> (i32, i32) {
    %c0_i32 = arith.constant 0 : i32
    %c0_i32_0 = arith.constant 0 : i32
    %c0_i32_1 = arith.constant 0 : i32
    return %c0_i32, %c0_i32_0 : i32, i32
  }
  func.func @transform_11(%arg0: i32) -> (i32, i32) {
    %c0_i32 = arith.constant 0 : i32
    %c0_i32_0 = arith.constant 0 : i32
    return %arg0, %c0_i32 : i32, i32
  }
}

</mosaic_0001>

<llo_original>
// kernel: network_forward.1
$region0: #{network_forward.1}
  #allocation0 [shape = 'u32[]', space=smem, size = 0x4, offset = 0x4, fixed_abs, tag = 'smem constant byte address 0x4 - core index']
  #allocation1 [shape = 'u32[144,128]{1,0:T(1,128)}', space=vmem, size = 0x12000, scoped, tag = 'internal scratch']
  %s0 = inlined_call_operand.vmem [shape: f32[7,8,108], index: 0, kind: input, shape index: {}]
  %s1 = inlined_call_operand.vmem [shape: f32[8,6], index: 1, kind: input, shape index: {}]
  %s2 = inlined_call_operand.vmem [shape: f32[108,224], index: 2, kind: input, shape index: {}]
  %s3 = inlined_call_operand.vmem [shape: f32[1,224], index: 3, kind: input, shape index: {}]
  %s4 = inlined_call_operand.hbm [shape: f32[7,224,128], index: 4, kind: input, shape index: {}]
  %s5 = inlined_call_operand.vmem [shape: f32[1,128], index: 5, kind: input, shape index: {}]
  %s6 = inlined_call_operand.vmem [shape: f32[128,64], index: 6, kind: input, shape index: {}]
  %s7 = inlined_call_operand.vmem [shape: f32[6,64], index: 7, kind: input, shape index: {}]
  %s8 = inlined_call_operand.vmem [shape: f32[1,64], index: 8, kind: input, shape index: {}]
  %s9 = inlined_call_operand.vmem [shape: f32[64,8], index: 9, kind: input, shape index: {}]
  %s10 = inlined_call_operand.vmem [shape: f32[1,8], index: 10, kind: input, shape index: {}]
  %s11 = inlined_call_operand.vmem [shape: f32[8,8], index: 11, kind: output, shape index: {}]
  %s12 = sld [smem:[#allocation0]]
  $region58: #{network_forward.1} parent=0
    _
  %s14 = ssub.s32 1, %s12
  %s15 = scalar_select 0, %s14, %s12
  $region1: #{network_forward.1} parent=0
    #allocation2 [shape = 'u8[802816]{0}', space=vmem, size = 0xc4000, scoped, tag = 'input window, operand 4, single buffered']
    #allocation3 [shape = 's32[1]{0}', space=sflag, size = 0x4, scoped, tag = 'scoped memory for network_forward.1']
    %16 = vsyncpa [#allocation3], 0
    // Predicated region
    $region2: #{network_forward.1} parent=1 // pred_check
      _
    $region3: #{network_forward.1} parent=1 // pred_check_branch
      %18 = sbr.rel (0) target = $region5
    $region4: #{network_forward.1} parent=1 // pred_region
      _
    $region5: #{network_forward.1} parent=1 // pred_fallthru
      _
    // Predicated region
    $region6: #{network_forward.1} parent=1 // pred_check
      _
    $region7: #{network_forward.1} parent=1 // pred_check_branch
      %20 = sbr.rel (0) target = $region9
    $region8: #{network_forward.1} parent=1 // pred_region
      _
    $region9: #{network_forward.1} parent=1 // pred_fallthru
      _
    // Predicated region
    $region10: #{network_forward.1} parent=1 // pred_check
      _
    $region11: #{network_forward.1} parent=1 // pred_check_branch
      %22 = sbr.rel (0) target = $region13
    $region12: #{network_forward.1} parent=1 // pred_region
      _
    $region13: #{network_forward.1} parent=1 // pred_fallthru
      _
    // Predicated region
    $region14: #{network_forward.1} parent=1 // pred_check
      _
    $region15: #{network_forward.1} parent=1 // pred_check_branch
      %24 = sbr.rel (0) target = $region17
    $region16: #{network_forward.1} parent=1 // pred_region
      _
    $region17: #{network_forward.1} parent=1 // pred_fallthru
      _
    // Predicated region
    $region18: #{network_forward.1} parent=1 // pred_check
      _
    $region19: #{network_forward.1} parent=1 // pred_check_branch
      %26 = sbr.rel (0) target = $region21
    $region20: #{network_forward.1} parent=1 // pred_region
      %s28 = ssub.s32 25088, 25088
      %29 = vsyncadd [#allocation3], %s28
      %s30 = sshll.u32 [#allocation2], 4
      %s31 = int_to_ptr.vmem [resolvable:$true] %s30
      %36 = dma.hbm_to_vmem [thread:$0]  %s4, 25088, %s31, [#allocation3], 128, 128, 8
    $region21: #{network_forward.1} parent=1 // pred_fallthru
      _
    // Predicated region
    $region22: #{network_forward.1} parent=1 // pred_check
      _
    $region23: #{network_forward.1} parent=1 // pred_check_branch
      %38 = sbr.rel (0) target = $region25
    $region24: #{network_forward.1} parent=1 // pred_region
      _
    $region25: #{network_forward.1} parent=1 // pred_fallthru
      _
    // Predicated region
    $region26: #{network_forward.1} parent=1 // pred_check
      _
    $region27: #{network_forward.1} parent=1 // pred_check_branch
      %40 = sbr.rel (0) target = $region29
    $region28: #{network_forward.1} parent=1 // pred_region
      _
    $region29: #{network_forward.1} parent=1 // pred_fallthru
      _
    // Predicated region
    $region30: #{network_forward.1} parent=1 // pred_check
      _
    $region31: #{network_forward.1} parent=1 // pred_check_branch
      %42 = sbr.rel (0) target = $region33
    $region32: #{network_forward.1} parent=1 // pred_region
      _
    $region33: #{network_forward.1} parent=1 // pred_fallthru
      _
    // Predicated region
    $region34: #{network_forward.1} parent=1 // pred_check
      _
    $region35: #{network_forward.1} parent=1 // pred_check_branch
      %44 = sbr.rel (0) target = $region37
    $region36: #{network_forward.1} parent=1 // pred_region
      _
    $region37: #{network_forward.1} parent=1 // pred_fallthru
      _
    // Predicated region
    $region38: #{network_forward.1} parent=1 // pred_check
      _
    $region39: #{network_forward.1} parent=1 // pred_check_branch
      %46 = sbr.rel (0) target = $region41
    $region40: #{network_forward.1} parent=1 // pred_region
      _
    $region41: #{network_forward.1} parent=1 // pred_fallthru
      _
    // Predicated region
    $region42: #{network_forward.1} parent=1 // pred_check
      _
    $region43: #{network_forward.1} parent=1 // pred_check_branch
      %48 = sbr.rel (0) target = $region45
    $region44: #{network_forward.1} parent=1 // pred_region
      _
    $region45: #{network_forward.1} parent=1 // pred_fallthru
      _
    // Predicated region
    $region46: #{network_forward.1} parent=1 // pred_check
      _
    $region47: #{network_forward.1} parent=1 // pred_check_branch
      %50 = sbr.rel (0) target = $region49
    $region48: #{network_forward.1} parent=1 // pred_region
      %51 = dma.done [#allocation3], 25088
    $region49: #{network_forward.1} parent=1 // pred_fallthru
      _
    %v52 = vld [vmem:[%s0] sm:$0xff]
    %v53 = vld [vmem:[%s0 + $0x8] sm:$0xff]
    %v54 = vld [vmem:[%s0 + $0x10] sm:$0xff]
    %v55 = vld [vmem:[%s0 + $0x18] sm:$0xff]
    %v56 = vld [vmem:[%s0 + $0x20] sm:$0xff]
    %v57 = vld [vmem:[%s0 + $0x28] sm:$0xff]
    %v58 = vld [vmem:[%s0 + $0x30] sm:$0xff]
    %v59 = vld [vmem:[%s2] sm:$0xff]
    %v60 = vld [vmem:[%s2 + $0x8] sm:$0xff]
    %v61 = vld [vmem:[%s2 + $0x10] sm:$0xff]
    %v62 = vld [vmem:[%s2 + $0x18] sm:$0xff]
    %v63 = vld [vmem:[%s2 + $0x20] sm:$0xff]
    %v64 = vld [vmem:[%s2 + $0x28] sm:$0xff]
    %v65 = vld [vmem:[%s2 + $0x30] sm:$0xff]
    %v66 = vld [vmem:[%s2 + $0x38] sm:$0xff]
    %v67 = vld [vmem:[%s2 + $0x40] sm:$0xff]
    %v68 = vld [vmem:[%s2 + $0x48] sm:$0xff]
    %v69 = vld [vmem:[%s2 + $0x50] sm:$0xff]
    %v70 = vld [vmem:[%s2 + $0x58] sm:$0xff]
    %v71 = vld [vmem:[%s2 + $0x60] sm:$0xff]
    %v72 = vld [vmem:[%s2 + $0x68] sm:$0xff]
    %v73 = vld [vmem:[%s2 + $0x70] sm:$0xff]
    %v74 = vld [vmem:[%s2 + $0x78] sm:$0xff]
    %v75 = vld [vmem:[%s2 + $0x80] sm:$0xff]
    %v76 = vld [vmem:[%s2 + $0x88] sm:$0xff]
    %v77 = vld [vmem:[%s2 + $0x90] sm:$0xff]
    %v78 = vld [vmem:[%s2 + $0x98] sm:$0xff]
    %v79 = vld [vmem:[%s2 + $0xa0] sm:$0xff]
    %v80 = vld [vmem:[%s2 + $0xa8] sm:$0xff]
    %v81 = vld [vmem:[%s2 + $0xb0] sm:$0xff]
    %v82 = vld [vmem:[%s2 + $0xb8] sm:$0xff]
    %v83 = vld [vmem:[%s2 + $0xc0] sm:$0xff]
    %v84 = vld [vmem:[%s2 + $0xc8] sm:$0xff]
    %v85 = vld [vmem:[%s2 + $0xd0] sm:$0xf]
    %v86 = vld [vmem:[%s2 + $0xd8] sm:$0xf]
    %v87 = vld [vmem:[%s3] sm:$0x3]
    %v89 = vlaneseq
    %v90 = vshrl.u32 %v89, 7
    %v91 = vsub.s32 0, %v90
    %v92 = vrot.slane %v87, %v91
    %v93 = vlaneseq
    %v94 = vshrl.u32 %v93, 7
    %v95 = vsub.s32 1, %v94
    %v96 = vrot.slane %v87, %v95
    %vm99 = vcmask 883712
    %v101 = vsel %vm99, %v52, 0
    %v104 = vsel %vm99, %v53, 0
    %v107 = vsel %vm99, %v54, 0
    %v110 = vsel %vm99, %v55, 0
    %v113 = vsel %vm99, %v56, 0
    %v116 = vsel %vm99, %v57, 0
    %v119 = vsel %vm99, %v58, 0
    %vm121 = vcmask 1043456
    %v123 = vsel %vm121, %v85, 0
    %v126 = vsel %vm121, %v86, 0
    %128 = vmatprep.subr.mxu0 0.0
    %129 = vmatpush1.msra.mxu0 0.0
    %130 = vmatprep.subr.mxu0 0.0
    %131 = vmatpush1.msra.mxu0 0.0
    %132 = vmatprep.subr.mxu0 %v126
    %133 = vmatpush1.msra.mxu0 %v123
    %134 = vmatprep.subr.mxu0 %v84
    %135 = vmatpush1.msra.mxu0 %v83
    %136 = vmatprep.subr.mxu0 %v82
    %137 = vmatpush1.msra.mxu0 %v81
    %138 = vmatprep.subr.mxu0 %v80
    %139 = vmatpush1.msra.mxu0 %v79
    %140 = vmatprep.subr.mxu0 %v78
    %141 = vmatpush1.msra.mxu0 %v77
    %142 = vmatprep.subr.mxu0 %v76
    %143 = vmatpush1.msra.mxu0 %v75
    %144 = vmatprep.subr.mxu0 %v74
    %145 = vmatpush1.msra.mxu0 %v73
    %146 = vmatprep.subr.mxu0 %v72
    %147 = vmatpush1.msra.mxu0 %v71
    %148 = vmatprep.subr.mxu0 %v70
    %149 = vmatpush1.msra.mxu0 %v69
    %150 = vmatprep.subr.mxu0 %v68
    %151 = vmatpush1.msra.mxu0 %v67
    %152 = vmatprep.subr.mxu0 %v66
    %153 = vmatpush1.msra.mxu0 %v65
    %154 = vmatprep.subr.mxu0 %v64
    %155 = vmatpush1.msra.mxu0 %v63
    %156 = vmatprep.subr.mxu0 %v62
    %157 = vmatpush1.msra.mxu0 %v61
    %158 = vmatprep.subr.mxu0 %v60
    %159 = vmatpush1.msra.mxu0 %v59
    %160 = vmatprep.subr.mxu0 0.0
    %161 = vmatpush2.msra.mxu0 0.0
    %162 = vmatprep.subr.mxu0 0.0
    %163 = vmatpush2.msra.mxu0 0.0
    %164 = vmatprep.subr.mxu0 0.0
    %165 = vmatpush2.msra.mxu0 0.0
    %166 = vmatprep.subr.mxu0 0.0
    %167 = vmatpush2.msra.mxu0 0.0
    %168 = vmatprep.subr.mxu0 0.0
    %169 = vmatpush2.msra.mxu0 0.0
    %170 = vmatprep.subr.mxu0 0.0
    %171 = vmatpush2.msra.mxu0 0.0
    %172 = vmatprep.subr.mxu0 0.0
    %173 = vmatpush2.msra.mxu0 0.0
    %174 = vmatprep.subr.mxu0 0.0
    %175 = vmatpush2.msra.mxu0 0.0
    %176 = vmatprep.subr.mxu0 0.0
    %177 = vmatpush2.msra.mxu0 0.0
    %178 = vmatprep.subr.mxu0 0.0
    %179 = vmatpush2.msra.mxu0 0.0
    %180 = vmatprep.subr.mxu0 0.0
    %181 = vmatpush2.msra.mxu0 0.0
    %182 = vmatprep.subr.mxu0 0.0
    %183 = vmatpush2.msra.mxu0 0.0
    %184 = vmatprep.subr.mxu0 0.0
    %185 = vmatpush2.msra.mxu0 0.0
    %186 = vmatprep.subr.mxu0 0.0
    %187 = vmatpush2.msra.mxu0 0.0
    %188 = vmatprep.subr.mxu0 0.0
    %189 = vmatpush2.msra.mxu0 0.0
    %190 = vmatprep.subr.mxu0 0.0
    %191 = vmatpush2.msra.mxu0 0.0
    %192 = vmatprep.mubr.f32.mxu0 0.0
    %193 = vmatmul.mubr.f32.gmra.mxu0 %v101
    %v194 = vpop.f32.mrf.mxu0
    %v195 = vadd.f32 %v92, %v194
    %v196 = vpop.f32.mrf.mxu0
    %v197 = vadd.f32 %v96, %v196
    %198 = vmatprep.mubr.f32.mxu0 0.0
    %199 = vmatmul.mubr.f32.gmra.mxu0 %v104
    %v200 = vpop.f32.mrf.mxu0
    %v201 = vadd.f32 %v92, %v200
    %v202 = vpop.f32.mrf.mxu0
    %v203 = vadd.f32 %v96, %v202
    %204 = vmatprep.mubr.f32.mxu0 0.0
    %205 = vmatmul.mubr.f32.gmra.mxu0 %v107
    %v206 = vpop.f32.mrf.mxu0
    %v207 = vadd.f32 %v92, %v206
    %v208 = vpop.f32.mrf.mxu0
    %v209 = vadd.f32 %v96, %v208
    %210 = vmatprep.mubr.f32.mxu0 0.0
    %211 = vmatmul.mubr.f32.gmra.mxu0 %v110
    %v212 = vpop.f32.mrf.mxu0
    %v213 = vadd.f32 %v92, %v212
    %v214 = vpop.f32.mrf.mxu0
    %v215 = vadd.f32 %v96, %v214
    %216 = vmatprep.mubr.f32.mxu0 0.0
    %217 = vmatmul.mubr.f32.gmra.mxu0 %v113
    %v218 = vpop.f32.mrf.mxu0
    %v219 = vadd.f32 %v92, %v218
    %v220 = vpop.f32.mrf.mxu0
    %v221 = vadd.f32 %v96, %v220
    %222 = vmatprep.mubr.f32.mxu0 0.0
    %223 = vmatmul.mubr.f32.gmra.mxu0 %v116
    %v224 = vpop.f32.mrf.mxu0
    %v225 = vadd.f32 %v92, %v224
    %v226 = vpop.f32.mrf.mxu0
    %v227 = vadd.f32 %v96, %v226
    %228 = vmatprep.mubr.f32.mxu0 0.0
    %229 = vmatmul.mubr.f32.gmra.mxu0 %v119
    %v230 = vpop.f32.mrf.mxu0
    %v231 = vadd.f32 %v92, %v230
    %v232 = vpop.f32.mrf.mxu0
    %v233 = vadd.f32 %v96, %v232
    %234 = vdwg.mxu0
    %v235 = vmax.f32 %v195, 0.0
    %v236 = vmax.f32 %v197, 0.0
    %v237 = vmax.f32 %v201, 0.0
    %v238 = vmax.f32 %v203, 0.0
    %v239 = vmax.f32 %v207, 0.0
    %v240 = vmax.f32 %v209, 0.0
    %v241 = vmax.f32 %v213, 0.0
    %v242 = vmax.f32 %v215, 0.0
    %v243 = vmax.f32 %v219, 0.0
    %v244 = vmax.f32 %v221, 0.0
    %v245 = vmax.f32 %v225, 0.0
    %v246 = vmax.f32 %v227, 0.0
    %v247 = vmax.f32 %v231, 0.0
    %v248 = vmax.f32 %v233, 0.0
    %v249 = vld [vmem:[#allocation2] sm:$0xff]
    %v250 = vld [vmem:[#allocation2 + $0x8] sm:$0xff]
    %v251 = vld [vmem:[#allocation2 + $0x10] sm:$0xff]
    %v252 = vld [vmem:[#allocation2 + $0x18] sm:$0xff]
    %v253 = vld [vmem:[#allocation2 + $0x20] sm:$0xff]
    %v254 = vld [vmem:[#allocation2 + $0x28] sm:$0xff]
    %v255 = vld [vmem:[#allocation2 + $0x30] sm:$0xff]
    %v256 = vld [vmem:[#allocation2 + $0x38] sm:$0xff]
    %v257 = vld [vmem:[#allocation2 + $0x40] sm:$0xff]
    %v258 = vld [vmem:[#allocation2 + $0x48] sm:$0xff]
    %v259 = vld [vmem:[#allocation2 + $0x50] sm:$0xff]
    %v260 = vld [vmem:[#allocation2 + $0x58] sm:$0xff]
    %v261 = vld [vmem:[#allocation2 + $0x60] sm:$0xff]
    %v262 = vld [vmem:[#allocation2 + $0x68] sm:$0xff]
    %v263 = vld [vmem:[#allocation2 + $0x70] sm:$0xff]
    %v264 = vld [vmem:[#allocation2 + $0x78] sm:$0xff]
    %v265 = vld [vmem:[#allocation2 + $0x80] sm:$0xff]
    %v266 = vld [vmem:[#allocation2 + $0x88] sm:$0xff]
    %v267 = vld [vmem:[#allocation2 + $0x90] sm:$0xff]
    %v268 = vld [vmem:[#allocation2 + $0x98] sm:$0xff]
    %v269 = vld [vmem:[#allocation2 + $0xa0] sm:$0xff]
    %v270 = vld [vmem:[#allocation2 + $0xa8] sm:$0xff]
    %v271 = vld [vmem:[#allocation2 + $0xb0] sm:$0xff]
    %v272 = vld [vmem:[#allocation2 + $0xb8] sm:$0xff]
    %v273 = vld [vmem:[#allocation2 + $0xc0] sm:$0xff]
    %v274 = vld [vmem:[#allocation2 + $0xc8] sm:$0xff]
    %v275 = vld [vmem:[#allocation2 + $0xd0] sm:$0xff]
    %v276 = vld [vmem:[#allocation2 + $0xd8] sm:$0xff]
    %v277 = vld [vmem:[#allocation2 + $0xe0] sm:$0xff]
    %v278 = vld [vmem:[#allocation2 + $0xe8] sm:$0xff]
    %v279 = vld [vmem:[#allocation2 + $0xf0] sm:$0xff]
    %v280 = vld [vmem:[#allocation2 + $0xf8] sm:$0xff]
    %v281 = vld [vmem:[#allocation2 + $0x100] sm:$0xff]
    %v282 = vld [vmem:[#allocation2 + $0x108] sm:$0xff]
    %v283 = vld [vmem:[#allocation2 + $0x110] sm:$0xff]
    %v284 = vld [vmem:[#allocation2 + $0x118] sm:$0xff]
    %v285 = vld [vmem:[#allocation2 + $0x120] sm:$0xff]
    %v286 = vld [vmem:[#allocation2 + $0x128] sm:$0xff]
    %v287 = vld [vmem:[#allocation2 + $0x130] sm:$0xff]
    %v288 = vld [vmem:[#allocation2 + $0x138] sm:$0xff]
    %v289 = vld [vmem:[#allocation2 + $0x140] sm:$0xff]
    %v290 = vld [vmem:[#allocation2 + $0x148] sm:$0xff]
    %v291 = vld [vmem:[#allocation2 + $0x150] sm:$0xff]
    %v292 = vld [vmem:[#allocation2 + $0x158] sm:$0xff]
    %v293 = vld [vmem:[#allocation2 + $0x160] sm:$0xff]
    %v294 = vld [vmem:[#allocation2 + $0x168] sm:$0xff]
    %v295 = vld [vmem:[#allocation2 + $0x170] sm:$0xff]
    %v296 = vld [vmem:[#allocation2 + $0x178] sm:$0xff]
    %v297 = vld [vmem:[#allocation2 + $0x180] sm:$0xff]
    %v298 = vld [vmem:[#allocation2 + $0x188] sm:$0xff]
    %v299 = vld [vmem:[#allocation2 + $0x190] sm:$0xff]
    %v300 = vld [vmem:[#allocation2 + $0x198] sm:$0xff]
    %v301 = vld [vmem:[#allocation2 + $0x1a0] sm:$0xff]
    %v302 = vld [vmem:[#allocation2 + $0x1a8] sm:$0xff]
    %v303 = vld [vmem:[#allocation2 + $0x1b0] sm:$0xff]
    %v304 = vld [vmem:[#allocation2 + $0x1b8] sm:$0xff]
    %v305 = vld [vmem:[#allocation2 + $0x1c0] sm:$0xff]
    %v306 = vld [vmem:[#allocation2 + $0x1c8] sm:$0xff]
    %v307 = vld [vmem:[#allocation2 + $0x1d0] sm:$0xff]
    %v308 = vld [vmem:[#allocation2 + $0x1d8] sm:$0xff]
    %v309 = vld [vmem:[#allocation2 + $0x1e0] sm:$0xff]
    %v310 = vld [vmem:[#allocation2 + $0x1e8] sm:$0xff]
    %v311 = vld [vmem:[#allocation2 + $0x1f0] sm:$0xff]
    %v312 = vld [vmem:[#allocation2 + $0x1f8] sm:$0xff]
    %v313 = vld [vmem:[#allocation2 + $0x200] sm:$0xff]
    %v314 = vld [vmem:[#allocation2 + $0x208] sm:$0xff]
    %v315 = vld [vmem:[#allocation2 + $0x210] sm:$0xff]
    %v316 = vld [vmem:[#allocation2 + $0x218] sm:$0xff]
    %v317 = vld [vmem:[#allocation2 + $0x220] sm:$0xff]
    %v318 = vld [vmem:[#allocation2 + $0x228] sm:$0xff]
    %v319 = vld [vmem:[#allocation2 + $0x230] sm:$0xff]
    %v320 = vld [vmem:[#allocation2 + $0x238] sm:$0xff]
    %v321 = vld [vmem:[#allocation2 + $0x240] sm:$0xff]
    %v322 = vld [vmem:[#allocation2 + $0x248] sm:$0xff]
    %v323 = vld [vmem:[#allocation2 + $0x250] sm:$0xff]
    %v324 = vld [vmem:[#allocation2 + $0x258] sm:$0xff]
    %v325 = vld [vmem:[#allocation2 + $0x260] sm:$0xff]
    %v326 = vld [vmem:[#allocation2 + $0x268] sm:$0xff]
    %v327 = vld [vmem:[#allocation2 + $0x270] sm:$0xff]
    %v328 = vld [vmem:[#allocation2 + $0x278] sm:$0xff]
    %v329 = vld [vmem:[#allocation2 + $0x280] sm:$0xff]
    %v330 = vld [vmem:[#allocation2 + $0x288] sm:$0xff]
    %v331 = vld [vmem:[#allocation2 + $0x290] sm:$0xff]
    %v332 = vld [vmem:[#allocation2 + $0x298] sm:$0xff]
    %v333 = vld [vmem:[#allocation2 + $0x2a0] sm:$0xff]
    %v334 = vld [vmem:[#allocation2 + $0x2a8] sm:$0xff]
    %v335 = vld [vmem:[#allocation2 + $0x2b0] sm:$0xff]
    %v336 = vld [vmem:[#allocation2 + $0x2b8] sm:$0xff]
    %v337 = vld [vmem:[#allocation2 + $0x2c0] sm:$0xff]
    %v338 = vld [vmem:[#allocation2 + $0x2c8] sm:$0xff]
    %v339 = vld [vmem:[#allocation2 + $0x2d0] sm:$0xff]
    %v340 = vld [vmem:[#allocation2 + $0x2d8] sm:$0xff]
    %v341 = vld [vmem:[#allocation2 + $0x2e0] sm:$0xff]
    %v342 = vld [vmem:[#allocation2 + $0x2e8] sm:$0xff]
    %v343 = vld [vmem:[#allocation2 + $0x2f0] sm:$0xff]
    %v344 = vld [vmem:[#allocation2 + $0x2f8] sm:$0xff]
    %v345 = vld [vmem:[#allocation2 + $0x300] sm:$0xff]
    %v346 = vld [vmem:[#allocation2 + $0x308] sm:$0xff]
    %v347 = vld [vmem:[#allocation2 + $0x310] sm:$0xff]
    %v348 = vld [vmem:[#allocation2 + $0x318] sm:$0xff]
    %v349 = vld [vmem:[#allocation2 + $0x320] sm:$0xff]
    %v350 = vld [vmem:[#allocation2 + $0x328] sm:$0xff]
    %v351 = vld [vmem:[#allocation2 + $0x330] sm:$0xff]
    %v352 = vld [vmem:[#allocation2 + $0x338] sm:$0xff]
    %v353 = vld [vmem:[#allocation2 + $0x340] sm:$0xff]
    %v354 = vld [vmem:[#allocation2 + $0x348] sm:$0xff]
    %v355 = vld [vmem:[#allocation2 + $0x350] sm:$0xff]
    %v356 = vld [vmem:[#allocation2 + $0x358] sm:$0xff]
    %v357 = vld [vmem:[#allocation2 + $0x360] sm:$0xff]
    %v358 = vld [vmem:[#allocation2 + $0x368] sm:$0xff]
    %v359 = vld [vmem:[#allocation2 + $0x370] sm:$0xff]
    %v360 = vld [vmem:[#allocation2 + $0x378] sm:$0xff]
    %v361 = vld [vmem:[#allocation2 + $0x380] sm:$0xff]
    %v362 = vld [vmem:[#allocation2 + $0x388] sm:$0xff]
    %v363 = vld [vmem:[#allocation2 + $0x390] sm:$0xff]
    %v364 = vld [vmem:[#allocation2 + $0x398] sm:$0xff]
    %v365 = vld [vmem:[#allocation2 + $0x3a0] sm:$0xff]
    %v366 = vld [vmem:[#allocation2 + $0x3a8] sm:$0xff]
    %v367 = vld [vmem:[#allocation2 + $0x3b0] sm:$0xff]
    %v368 = vld [vmem:[#allocation2 + $0x3b8] sm:$0xff]
    %v369 = vld [vmem:[#allocation2 + $0x3c0] sm:$0xff]
    %v370 = vld [vmem:[#allocation2 + $0x3c8] sm:$0xff]
    %v371 = vld [vmem:[#allocation2 + $0x3d0] sm:$0xff]
    %v372 = vld [vmem:[#allocation2 + $0x3d8] sm:$0xff]
    %v373 = vld [vmem:[#allocation2 + $0x3e0] sm:$0xff]
    %v374 = vld [vmem:[#allocation2 + $0x3e8] sm:$0xff]
    %v375 = vld [vmem:[#allocation2 + $0x3f0] sm:$0xff]
    %v376 = vld [vmem:[#allocation2 + $0x3f8] sm:$0xff]
    %v377 = vld [vmem:[#allocation2 + $0x400] sm:$0xff]
    %v378 = vld [vmem:[#allocation2 + $0x408] sm:$0xff]
    %v379 = vld [vmem:[#allocation2 + $0x410] sm:$0xff]
    %v380 = vld [vmem:[#allocation2 + $0x418] sm:$0xff]
    %v381 = vld [vmem:[#allocation2 + $0x420] sm:$0xff]
    %v382 = vld [vmem:[#allocation2 + $0x428] sm:$0xff]
    %v383 = vld [vmem:[#allocation2 + $0x430] sm:$0xff]
    %v384 = vld [vmem:[#allocation2 + $0x438] sm:$0xff]
    %v385 = vld [vmem:[#allocation2 + $0x440] sm:$0xff]
    %v386 = vld [vmem:[#allocation2 + $0x448] sm:$0xff]
    %v387 = vld [vmem:[#allocation2 + $0x450] sm:$0xff]
    %v388 = vld [vmem:[#allocation2 + $0x458] sm:$0xff]
    %v389 = vld [vmem:[#allocation2 + $0x460] sm:$0xff]
    %v390 = vld [vmem:[#allocation2 + $0x468] sm:$0xff]
    %v391 = vld [vmem:[#allocation2 + $0x470] sm:$0xff]
    %v392 = vld [vmem:[#allocation2 + $0x478] sm:$0xff]
    %v393 = vld [vmem:[#allocation2 + $0x480] sm:$0xff]
    %v394 = vld [vmem:[#allocation2 + $0x488] sm:$0xff]
    %v395 = vld [vmem:[#allocation2 + $0x490] sm:$0xff]
    %v396 = vld [vmem:[#allocation2 + $0x498] sm:$0xff]
    %v397 = vld [vmem:[#allocation2 + $0x4a0] sm:$0xff]
    %v398 = vld [vmem:[#allocation2 + $0x4a8] sm:$0xff]
    %v399 = vld [vmem:[#allocation2 + $0x4b0] sm:$0xff]
    %v400 = vld [vmem:[#allocation2 + $0x4b8] sm:$0xff]
    %v401 = vld [vmem:[#allocation2 + $0x4c0] sm:$0xff]
    %v402 = vld [vmem:[#allocation2 + $0x4c8] sm:$0xff]
    %v403 = vld [vmem:[#allocation2 + $0x4d0] sm:$0xff]
    %v404 = vld [vmem:[#allocation2 + $0x4d8] sm:$0xff]
    %v405 = vld [vmem:[#allocation2 + $0x4e0] sm:$0xff]
    %v406 = vld [vmem:[#allocation2 + $0x4e8] sm:$0xff]
    %v407 = vld [vmem:[#allocation2 + $0x4f0] sm:$0xff]
    %v408 = vld [vmem:[#allocation2 + $0x4f8] sm:$0xff]
    %v409 = vld [vmem:[#allocation2 + $0x500] sm:$0xff]
    %v410 = vld [vmem:[#allocation2 + $0x508] sm:$0xff]
    %v411 = vld [vmem:[#allocation2 + $0x510] sm:$0xff]
    %v412 = vld [vmem:[#allocation2 + $0x518] sm:$0xff]
    %v413 = vld [vmem:[#allocation2 + $0x520] sm:$0xff]
    %v414 = vld [vmem:[#allocation2 + $0x528] sm:$0xff]
    %v415 = vld [vmem:[#allocation2 + $0x530] sm:$0xff]
    %v416 = vld [vmem:[#allocation2 + $0x538] sm:$0xff]
    %v417 = vld [vmem:[#allocation2 + $0x540] sm:$0xff]
    %v418 = vld [vmem:[#allocation2 + $0x548] sm:$0xff]
    %v419 = vld [vmem:[#allocation2 + $0x550] sm:$0xff]
    %v420 = vld [vmem:[#allocation2 + $0x558] sm:$0xff]
    %v421 = vld [vmem:[#allocation2 + $0x560] sm:$0xff]
    %v422 = vld [vmem:[#allocation2 + $0x568] sm:$0xff]
    %v423 = vld [vmem:[#allocation2 + $0x570] sm:$0xff]
    %v424 = vld [vmem:[#allocation2 + $0x578] sm:$0xff]
    %v425 = vld [vmem:[#allocation2 + $0x580] sm:$0xff]
    %v426 = vld [vmem:[#allocation2 + $0x588] sm:$0xff]
    %v427 = vld [vmem:[#allocation2 + $0x590] sm:$0xff]
    %v428 = vld [vmem:[#allocation2 + $0x598] sm:$0xff]
    %v429 = vld [vmem:[#allocation2 + $0x5a0] sm:$0xff]
    %v430 = vld [vmem:[#allocation2 + $0x5a8] sm:$0xff]
    %v431 = vld [vmem:[#allocation2 + $0x5b0] sm:$0xff]
    %v432 = vld [vmem:[#allocation2 + $0x5b8] sm:$0xff]
    %v433 = vld [vmem:[#allocation2 + $0x5c0] sm:$0xff]
    %v434 = vld [vmem:[#allocation2 + $0x5c8] sm:$0xff]
    %v435 = vld [vmem:[#allocation2 + $0x5d0] sm:$0xff]
    %v436 = vld [vmem:[#allocation2 + $0x5d8] sm:$0xff]
    %v437 = vld [vmem:[#allocation2 + $0x5e0] sm:$0xff]
    %v438 = vld [vmem:[#allocation2 + $0x5e8] sm:$0xff]
    %v439 = vld [vmem:[#allocation2 + $0x5f0] sm:$0xff]
    %v440 = vld [vmem:[#allocation2 + $0x5f8] sm:$0xff]
    %v441 = vld [vmem:[#allocation2 + $0x600] sm:$0xff]
    %v442 = vld [vmem:[#allocation2 + $0x608] sm:$0xff]
    %v443 = vld [vmem:[#allocation2 + $0x610] sm:$0xff]
    %v444 = vld [vmem:[#allocation2 + $0x618] sm:$0xff]
    %vm445 = vcmask 785408
    %v447 = vsel %vm445, %v238, 0
    %449 = vmatprep.subr.mxu0 0.0
    %450 = vmatpush1.msra.mxu0 %v292
    %451 = vmatprep.subr.mxu0 0.0
    %452 = vmatpush1.msra.mxu0 %v291
    %453 = vmatprep.subr.mxu0 0.0
    %454 = vmatpush1.msra.mxu0 %v290
    %455 = vmatprep.subr.mxu0 0.0
    %456 = vmatpush1.msra.mxu0 %v289
    %457 = vmatprep.subr.mxu0 0.0
    %458 = vmatpush1.msra.mxu0 %v288
    %459 = vmatprep.subr.mxu0 0.0
    %460 = vmatpush1.msra.mxu0 %v287
    %461 = vmatprep.subr.mxu0 0.0
    %462 = vmatpush1.msra.mxu0 %v286
    %463 = vmatprep.subr.mxu0 0.0
    %464 = vmatpush1.msra.mxu0 %v285
    %465 = vmatprep.subr.mxu0 0.0
    %466 = vmatpush1.msra.mxu0 %v284
    %467 = vmatprep.subr.mxu0 0.0
    %468 = vmatpush1.msra.mxu0 %v283
    %469 = vmatprep.subr.mxu0 0.0
    %470 = vmatpush1.msra.mxu0 %v282
    %471 = vmatprep.subr.mxu0 0.0
    %472 = vmatpush1.msra.mxu0 %v281
    %473 = vmatprep.subr.mxu0 0.0
    %474 = vmatpush1.msra.mxu0 %v280
    %475 = vmatprep.subr.mxu0 0.0
    %476 = vmatpush1.msra.mxu0 %v279
    %477 = vmatprep.subr.mxu0 0.0
    %478 = vmatpush1.msra.mxu0 %v278
    %479 = vmatprep.subr.mxu0 0.0
    %480 = vmatpush1.msra.mxu0 %v277
    %481 = vmatprep.subr.mxu0 0.0
    %482 = vmatpush2.msra.mxu0 0.0
    %483 = vmatprep.subr.mxu0 0.0
    %484 = vmatpush2.msra.mxu0 0.0
    %485 = vmatprep.subr.mxu0 0.0
    %486 = vmatpush2.msra.mxu0 0.0
    %487 = vmatprep.subr.mxu0 0.0
    %488 = vmatpush2.msra.mxu0 0.0
    %489 = vmatprep.subr.mxu0 0.0
    %490 = vmatpush2.msra.mxu0 %v304
    %491 = vmatprep.subr.mxu0 0.0
    %492 = vmatpush2.msra.mxu0 %v303
    %493 = vmatprep.subr.mxu0 0.0
    %494 = vmatpush2.msra.mxu0 %v302
    %495 = vmatprep.subr.mxu0 0.0
    %496 = vmatpush2.msra.mxu0 %v301
    %497 = vmatprep.subr.mxu0 0.0
    %498 = vmatpush2.msra.mxu0 %v300
    %499 = vmatprep.subr.mxu0 0.0
    %500 = vmatpush2.msra.mxu0 %v299
    %501 = vmatprep.subr.mxu0 0.0
    %502 = vmatpush2.msra.mxu0 %v298
    %503 = vmatprep.subr.mxu0 0.0
    %504 = vmatpush2.msra.mxu0 %v297
    %505 = vmatprep.subr.mxu0 0.0
    %506 = vmatpush2.msra.mxu0 %v296
    %507 = vmatprep.subr.mxu0 0.0
    %508 = vmatpush2.msra.mxu0 %v295
    %509 = vmatprep.subr.mxu0 0.0
    %510 = vmatpush2.msra.mxu0 %v294
    %511 = vmatprep.subr.mxu0 0.0
    %512 = vmatpush2.msra.mxu0 %v293
    %513 = vmatprep.mubr.f32.mxu0 %v447
    %514 = vmatmul.mubr.f32.gmra.mxu0 %v237
    %v515 = vpop.f32.mrf.mxu0
    %v516 = vadd.f32 0.0, %v515
    %v517 = vpop.f32.mrf.mxu0
    %518 = vdwg.mxu0
    %v520 = vsel %vm445, %v236, 0
    %522 = vmatprep.subr.mxu0 0.0
    %523 = vmatpush1.msra.mxu0 %v264
    %524 = vmatprep.subr.mxu0 0.0
    %525 = vmatpush1.msra.mxu0 %v263
    %526 = vmatprep.subr.mxu0 0.0
    %527 = vmatpush1.msra.mxu0 %v262
    %528 = vmatprep.subr.mxu0 0.0
    %529 = vmatpush1.msra.mxu0 %v261
    %530 = vmatprep.subr.mxu0 0.0
    %531 = vmatpush1.msra.mxu0 %v260
    %532 = vmatprep.subr.mxu0 0.0
    %533 = vmatpush1.msra.mxu0 %v259
    %534 = vmatprep.subr.mxu0 0.0
    %535 = vmatpush1.msra.mxu0 %v258
    %536 = vmatprep.subr.mxu0 0.0
    %537 = vmatpush1.msra.mxu0 %v257
    %538 = vmatprep.subr.mxu0 0.0
    %539 = vmatpush1.msra.mxu0 %v256
    %540 = vmatprep.subr.mxu0 0.0
    %541 = vmatpush1.msra.mxu0 %v255
    %542 = vmatprep.subr.mxu0 0.0
    %543 = vmatpush1.msra.mxu0 %v254
    %544 = vmatprep.subr.mxu0 0.0
    %545 = vmatpush1.msra.mxu0 %v253
    %546 = vmatprep.subr.mxu0 0.0
    %547 = vmatpush1.msra.mxu0 %v252
    %548 = vmatprep.subr.mxu0 0.0
    %549 = vmatpush1.msra.mxu0 %v251
    %550 = vmatprep.subr.mxu0 0.0
    %551 = vmatpush1.msra.mxu0 %v250
    %552 = vmatprep.subr.mxu0 0.0
    %553 = vmatpush1.msra.mxu0 %v249
    %554 = vmatprep.subr.mxu0 0.0
    %555 = vmatpush2.msra.mxu0 0.0
    %556 = vmatprep.subr.mxu0 0.0
    %557 = vmatpush2.msra.mxu0 0.0
    %558 = vmatprep.subr.mxu0 0.0
    %559 = vmatpush2.msra.mxu0 0.0
    %560 = vmatprep.subr.mxu0 0.0
    %561 = vmatpush2.msra.mxu0 0.0
    %562 = vmatprep.subr.mxu0 0.0
    %563 = vmatpush2.msra.mxu0 %v276
    %564 = vmatprep.subr.mxu0 0.0
    %565 = vmatpush2.msra.mxu0 %v275
    %566 = vmatprep.subr.mxu0 0.0
    %567 = vmatpush2.msra.mxu0 %v274
    %568 = vmatprep.subr.mxu0 0.0
    %569 = vmatpush2.msra.mxu0 %v273
    %570 = vmatprep.subr.mxu0 0.0
    %571 = vmatpush2.msra.mxu0 %v272
    %572 = vmatprep.subr.mxu0 0.0
    %573 = vmatpush2.msra.mxu0 %v271
    %574 = vmatprep.subr.mxu0 0.0
    %575 = vmatpush2.msra.mxu0 %v270
    %576 = vmatprep.subr.mxu0 0.0
    %577 = vmatpush2.msra.mxu0 %v269
    %578 = vmatprep.subr.mxu0 0.0
    %579 = vmatpush2.msra.mxu0 %v268
    %580 = vmatprep.subr.mxu0 0.0
    %581 = vmatpush2.msra.mxu0 %v267
    %582 = vmatprep.subr.mxu0 0.0
    %583 = vmatpush2.msra.mxu0 %v266
    %584 = vmatprep.subr.mxu0 0.0
    %585 = vmatpush2.msra.mxu0 %v265
    %586 = vmatprep.mubr.f32.mxu0 %v520
    %587 = vmatmul.mubr.f32.gmra.mxu0 %v235
    %v588 = vpop.f32.mrf.mxu0
    %v589 = vadd.f32 %v516, %v588
    %v590 = vpop.f32.mrf.mxu0
    %591 = vdwg.mxu0
    %v593 = vsel %vm445, %v240, 0
    %595 = vmatprep.subr.mxu0 0.0
    %596 = vmatpush1.msra.mxu0 %v320
    %597 = vmatprep.subr.mxu0 0.0
    %598 = vmatpush1.msra.mxu0 %v319
    %599 = vmatprep.subr.mxu0 0.0
    %600 = vmatpush1.msra.mxu0 %v318
    %601 = vmatprep.subr.mxu0 0.0
    %602 = vmatpush1.msra.mxu0 %v317
    %603 = vmatprep.subr.mxu0 0.0
    %604 = vmatpush1.msra.mxu0 %v316
    %605 = vmatprep.subr.mxu0 0.0
    %606 = vmatpush1.msra.mxu0 %v315
    %607 = vmatprep.subr.mxu0 0.0
    %608 = vmatpush1.msra.mxu0 %v314
    %609 = vmatprep.subr.mxu0 0.0
    %610 = vmatpush1.msra.mxu0 %v313
    %611 = vmatprep.subr.mxu0 0.0
    %612 = vmatpush1.msra.mxu0 %v312
    %613 = vmatprep.subr.mxu0 0.0
    %614 = vmatpush1.msra.mxu0 %v311
    %615 = vmatprep.subr.mxu0 0.0
    %616 = vmatpush1.msra.mxu0 %v310
    %617 = vmatprep.subr.mxu0 0.0
    %618 = vmatpush1.msra.mxu0 %v309
    %619 = vmatprep.subr.mxu0 0.0
    %620 = vmatpush1.msra.mxu0 %v308
    %621 = vmatprep.subr.mxu0 0.0
    %622 = vmatpush1.msra.mxu0 %v307
    %623 = vmatprep.subr.mxu0 0.0
    %624 = vmatpush1.msra.mxu0 %v306
    %625 = vmatprep.subr.mxu0 0.0
    %626 = vmatpush1.msra.mxu0 %v305
    %627 = vmatprep.subr.mxu0 0.0
    %628 = vmatpush2.msra.mxu0 0.0
    %629 = vmatprep.subr.mxu0 0.0
    %630 = vmatpush2.msra.mxu0 0.0
    %631 = vmatprep.subr.mxu0 0.0
    %632 = vmatpush2.msra.mxu0 0.0
    %633 = vmatprep.subr.mxu0 0.0
    %634 = vmatpush2.msra.mxu0 0.0
    %635 = vmatprep.subr.mxu0 0.0
    %636 = vmatpush2.msra.mxu0 %v332
    %637 = vmatprep.subr.mxu0 0.0
    %638 = vmatpush2.msra.mxu0 %v331
    %639 = vmatprep.subr.mxu0 0.0
    %640 = vmatpush2.msra.mxu0 %v330
    %641 = vmatprep.subr.mxu0 0.0
    %642 = vmatpush2.msra.mxu0 %v329
    %643 = vmatprep.subr.mxu0 0.0
    %644 = vmatpush2.msra.mxu0 %v328
    %645 = vmatprep.subr.mxu0 0.0
    %646 = vmatpush2.msra.mxu0 %v327
    %647 = vmatprep.subr.mxu0 0.0
    %648 = vmatpush2.msra.mxu0 %v326
    %649 = vmatprep.subr.mxu0 0.0
    %650 = vmatpush2.msra.mxu0 %v325
    %651 = vmatprep.subr.mxu0 0.0
    %652 = vmatpush2.msra.mxu0 %v324
    %653 = vmatprep.subr.mxu0 0.0
    %654 = vmatpush2.msra.mxu0 %v323
    %655 = vmatprep.subr.mxu0 0.0
    %656 = vmatpush2.msra.mxu0 %v322
    %657 = vmatprep.subr.mxu0 0.0
    %658 = vmatpush2.msra.mxu0 %v321
    %659 = vmatprep.mubr.f32.mxu0 %v593
    %660 = vmatmul.mubr.f32.gmra.mxu0 %v239
    %v661 = vpop.f32.mrf.mxu0
    %v662 = vadd.f32 0.0, %v661
    %v663 = vpop.f32.mrf.mxu0
    %664 = vdwg.mxu0
    %v665 = vadd.f32 %v589, %v662
    %v667 = vsel %vm445, %v242, 0
    %669 = vmatprep.subr.mxu0 0.0
    %670 = vmatpush1.msra.mxu0 %v348
    %671 = vmatprep.subr.mxu0 0.0
    %672 = vmatpush1.msra.mxu0 %v347
    %673 = vmatprep.subr.mxu0 0.0
    %674 = vmatpush1.msra.mxu0 %v346
    %675 = vmatprep.subr.mxu0 0.0
    %676 = vmatpush1.msra.mxu0 %v345
    %677 = vmatprep.subr.mxu0 0.0
    %678 = vmatpush1.msra.mxu0 %v344
    %679 = vmatprep.subr.mxu0 0.0
    %680 = vmatpush1.msra.mxu0 %v343
    %681 = vmatprep.subr.mxu0 0.0
    %682 = vmatpush1.msra.mxu0 %v342
    %683 = vmatprep.subr.mxu0 0.0
    %684 = vmatpush1.msra.mxu0 %v341
    %685 = vmatprep.subr.mxu0 0.0
    %686 = vmatpush1.msra.mxu0 %v340
    %687 = vmatprep.subr.mxu0 0.0
    %688 = vmatpush1.msra.mxu0 %v339
    %689 = vmatprep.subr.mxu0 0.0
    %690 = vmatpush1.msra.mxu0 %v338
    %691 = vmatprep.subr.mxu0 0.0
    %692 = vmatpush1.msra.mxu0 %v337
    %693 = vmatprep.subr.mxu0 0.0
    %694 = vmatpush1.msra.mxu0 %v336
    %695 = vmatprep.subr.mxu0 0.0
    %696 = vmatpush1.msra.mxu0 %v335
    %697 = vmatprep.subr.mxu0 0.0
    %698 = vmatpush1.msra.mxu0 %v334
    %699 = vmatprep.subr.mxu0 0.0
    %700 = vmatpush1.msra.mxu0 %v333
    %701 = vmatprep.subr.mxu0 0.0
    %702 = vmatpush2.msra.mxu0 0.0
    %703 = vmatprep.subr.mxu0 0.0
    %704 = vmatpush2.msra.mxu0 0.0
    %705 = vmatprep.subr.mxu0 0.0
    %706 = vmatpush2.msra.mxu0 0.0
    %707 = vmatprep.subr.mxu0 0.0
    %708 = vmatpush2.msra.mxu0 0.0
    %709 = vmatprep.subr.mxu0 0.0
    %710 = vmatpush2.msra.mxu0 %v360
    %711 = vmatprep.subr.mxu0 0.0
    %712 = vmatpush2.msra.mxu0 %v359
    %713 = vmatprep.subr.mxu0 0.0
    %714 = vmatpush2.msra.mxu0 %v358
    %715 = vmatprep.subr.mxu0 0.0
    %716 = vmatpush2.msra.mxu0 %v357
    %717 = vmatprep.subr.mxu0 0.0
    %718 = vmatpush2.msra.mxu0 %v356
    %719 = vmatprep.subr.mxu0 0.0
    %720 = vmatpush2.msra.mxu0 %v355
    %721 = vmatprep.subr.mxu0 0.0
    %722 = vmatpush2.msra.mxu0 %v354
    %723 = vmatprep.subr.mxu0 0.0
    %724 = vmatpush2.msra.mxu0 %v353
    %725 = vmatprep.subr.mxu0 0.0
    %726 = vmatpush2.msra.mxu0 %v352
    %727 = vmatprep.subr.mxu0 0.0
    %728 = vmatpush2.msra.mxu0 %v351
    %729 = vmatprep.subr.mxu0 0.0
    %730 = vmatpush2.msra.mxu0 %v350
    %731 = vmatprep.subr.mxu0 0.0
    %732 = vmatpush2.msra.mxu0 %v349
    %733 = vmatprep.mubr.f32.mxu0 %v667
    %734 = vmatmul.mubr.f32.gmra.mxu0 %v241
    %v735 = vpop.f32.mrf.mxu0
    %v736 = vadd.f32 0.0, %v735
    %v737 = vpop.f32.mrf.mxu0
    %738 = vdwg.mxu0
    %v739 = vadd.f32 %v665, %v736
    %v741 = vsel %vm445, %v244, 0
    %743 = vmatprep.subr.mxu0 0.0
    %744 = vmatpush1.msra.mxu0 %v376
    %745 = vmatprep.subr.mxu0 0.0
    %746 = vmatpush1.msra.mxu0 %v375
    %747 = vmatprep.subr.mxu0 0.0
    %748 = vmatpush1.msra.mxu0 %v374
    %749 = vmatprep.subr.mxu0 0.0
    %750 = vmatpush1.msra.mxu0 %v373
    %751 = vmatprep.subr.mxu0 0.0
    %752 = vmatpush1.msra.mxu0 %v372
    %753 = vmatprep.subr.mxu0 0.0
    %754 = vmatpush1.msra.mxu0 %v371
    %755 = vmatprep.subr.mxu0 0.0
    %756 = vmatpush1.msra.mxu0 %v370
    %757 = vmatprep.subr.mxu0 0.0
    %758 = vmatpush1.msra.mxu0 %v369
    %759 = vmatprep.subr.mxu0 0.0
    %760 = vmatpush1.msra.mxu0 %v368
    %761 = vmatprep.subr.mxu0 0.0
    %762 = vmatpush1.msra.mxu0 %v367
    %763 = vmatprep.subr.mxu0 0.0
    %764 = vmatpush1.msra.mxu0 %v366
    %765 = vmatprep.subr.mxu0 0.0
    %766 = vmatpush1.msra.mxu0 %v365
    %767 = vmatprep.subr.mxu0 0.0
    %768 = vmatpush1.msra.mxu0 %v364
    %769 = vmatprep.subr.mxu0 0.0
    %770 = vmatpush1.msra.mxu0 %v363
    %771 = vmatprep.subr.mxu0 0.0
    %772 = vmatpush1.msra.mxu0 %v362
    %773 = vmatprep.subr.mxu0 0.0
    %774 = vmatpush1.msra.mxu0 %v361
    %775 = vmatprep.subr.mxu0 0.0
    %776 = vmatpush2.msra.mxu0 0.0
    %777 = vmatprep.subr.mxu0 0.0
    %778 = vmatpush2.msra.mxu0 0.0
    %779 = vmatprep.subr.mxu0 0.0
    %780 = vmatpush2.msra.mxu0 0.0
    %781 = vmatprep.subr.mxu0 0.0
    %782 = vmatpush2.msra.mxu0 0.0
    %783 = vmatprep.subr.mxu0 0.0
    %784 = vmatpush2.msra.mxu0 %v388
    %785 = vmatprep.subr.mxu0 0.0
    %786 = vmatpush2.msra.mxu0 %v387
    %787 = vmatprep.subr.mxu0 0.0
    %788 = vmatpush2.msra.mxu0 %v386
    %789 = vmatprep.subr.mxu0 0.0
    %790 = vmatpush2.msra.mxu0 %v385
    %791 = vmatprep.subr.mxu0 0.0
    %792 = vmatpush2.msra.mxu0 %v384
    %793 = vmatprep.subr.mxu0 0.0
    %794 = vmatpush2.msra.mxu0 %v383
    %795 = vmatprep.subr.mxu0 0.0
    %796 = vmatpush2.msra.mxu0 %v382
    %797 = vmatprep.subr.mxu0 0.0
    %798 = vmatpush2.msra.mxu0 %v381
    %799 = vmatprep.subr.mxu0 0.0
    %800 = vmatpush2.msra.mxu0 %v380
    %801 = vmatprep.subr.mxu0 0.0
    %802 = vmatpush2.msra.mxu0 %v379
    %803 = vmatprep.subr.mxu0 0.0
    %804 = vmatpush2.msra.mxu0 %v378
    %805 = vmatprep.subr.mxu0 0.0
    %806 = vmatpush2.msra.mxu0 %v377
    %807 = vmatprep.mubr.f32.mxu0 %v741
    %808 = vmatmul.mubr.f32.gmra.mxu0 %v243
    %v809 = vpop.f32.mrf.mxu0
    %v810 = vadd.f32 0.0, %v809
    %v811 = vpop.f32.mrf.mxu0
    %812 = vdwg.mxu0
    %v813 = vadd.f32 %v739, %v810
    %v815 = vsel %vm445, %v246, 0
    %817 = vmatprep.subr.mxu0 0.0
    %818 = vmatpush1.msra.mxu0 %v404
    %819 = vmatprep.subr.mxu0 0.0
    %820 = vmatpush1.msra.mxu0 %v403
    %821 = vmatprep.subr.mxu0 0.0
    %822 = vmatpush1.msra.mxu0 %v402
    %823 = vmatprep.subr.mxu0 0.0
    %824 = vmatpush1.msra.mxu0 %v401
    %825 = vmatprep.subr.mxu0 0.0
    %826 = vmatpush1.msra.mxu0 %v400
    %827 = vmatprep.subr.mxu0 0.0
    %828 = vmatpush1.msra.mxu0 %v399
    %829 = vmatprep.subr.mxu0 0.0
    %830 = vmatpush1.msra.mxu0 %v398
    %831 = vmatprep.subr.mxu0 0.0
    %832 = vmatpush1.msra.mxu0 %v397
    %833 = vmatprep.subr.mxu0 0.0
    %834 = vmatpush1.msra.mxu0 %v396
    %835 = vmatprep.subr.mxu0 0.0
    %836 = vmatpush1.msra.mxu0 %v395
    %837 = vmatprep.subr.mxu0 0.0
    %838 = vmatpush1.msra.mxu0 %v394
    %839 = vmatprep.subr.mxu0 0.0
    %840 = vmatpush1.msra.mxu0 %v393
    %841 = vmatprep.subr.mxu0 0.0
    %842 = vmatpush1.msra.mxu0 %v392
    %843 = vmatprep.subr.mxu0 0.0
    %844 = vmatpush1.msra.mxu0 %v391
    %845 = vmatprep.subr.mxu0 0.0
    %846 = vmatpush1.msra.mxu0 %v390
    %847 = vmatprep.subr.mxu0 0.0
    %848 = vmatpush1.msra.mxu0 %v389
    %849 = vmatprep.subr.mxu0 0.0
    %850 = vmatpush2.msra.mxu0 0.0
    %851 = vmatprep.subr.mxu0 0.0
    %852 = vmatpush2.msra.mxu0 0.0
    %853 = vmatprep.subr.mxu0 0.0
    %854 = vmatpush2.msra.mxu0 0.0
    %855 = vmatprep.subr.mxu0 0.0
    %856 = vmatpush2.msra.mxu0 0.0
    %857 = vmatprep.subr.mxu0 0.0
    %858 = vmatpush2.msra.mxu0 %v416
    %859 = vmatprep.subr.mxu0 0.0
    %860 = vmatpush2.msra.mxu0 %v415
    %861 = vmatprep.subr.mxu0 0.0
    %862 = vmatpush2.msra.mxu0 %v414
    %863 = vmatprep.subr.mxu0 0.0
    %864 = vmatpush2.msra.mxu0 %v413
    %865 = vmatprep.subr.mxu0 0.0
    %866 = vmatpush2.msra.mxu0 %v412
    %867 = vmatprep.subr.mxu0 0.0
    %868 = vmatpush2.msra.mxu0 %v411
    %869 = vmatprep.subr.mxu0 0.0
    %870 = vmatpush2.msra.mxu0 %v410
    %871 = vmatprep.subr.mxu0 0.0
    %872 = vmatpush2.msra.mxu0 %v409
    %873 = vmatprep.subr.mxu0 0.0
    %874 = vmatpush2.msra.mxu0 %v408
    %875 = vmatprep.subr.mxu0 0.0
    %876 = vmatpush2.msra.mxu0 %v407
    %877 = vmatprep.subr.mxu0 0.0
    %878 = vmatpush2.msra.mxu0 %v406
    %879 = vmatprep.subr.mxu0 0.0
    %880 = vmatpush2.msra.mxu0 %v405
    %881 = vmatprep.mubr.f32.mxu0 %v815
    %882 = vmatmul.mubr.f32.gmra.mxu0 %v245
    %v883 = vpop.f32.mrf.mxu0
    %v884 = vadd.f32 0.0, %v883
    %v885 = vpop.f32.mrf.mxu0
    %886 = vdwg.mxu0
    %v887 = vadd.f32 %v813, %v884
    %v889 = vsel %vm445, %v248, 0
    %891 = vmatprep.subr.mxu0 0.0
    %892 = vmatpush1.msra.mxu0 %v432
    %893 = vmatprep.subr.mxu0 0.0
    %894 = vmatpush1.msra.mxu0 %v431
    %895 = vmatprep.subr.mxu0 0.0
    %896 = vmatpush1.msra.mxu0 %v430
    %897 = vmatprep.subr.mxu0 0.0
    %898 = vmatpush1.msra.mxu0 %v429
    %899 = vmatprep.subr.mxu0 0.0
    %900 = vmatpush1.msra.mxu0 %v428
    %901 = vmatprep.subr.mxu0 0.0
    %902 = vmatpush1.msra.mxu0 %v427
    %903 = vmatprep.subr.mxu0 0.0
    %904 = vmatpush1.msra.mxu0 %v426
    %905 = vmatprep.subr.mxu0 0.0
    %906 = vmatpush1.msra.mxu0 %v425
    %907 = vmatprep.subr.mxu0 0.0
    %908 = vmatpush1.msra.mxu0 %v424
    %909 = vmatprep.subr.mxu0 0.0
    %910 = vmatpush1.msra.mxu0 %v423
    %911 = vmatprep.subr.mxu0 0.0
    %912 = vmatpush1.msra.mxu0 %v422
    %913 = vmatprep.subr.mxu0 0.0
    %914 = vmatpush1.msra.mxu0 %v421
    %915 = vmatprep.subr.mxu0 0.0
    %916 = vmatpush1.msra.mxu0 %v420
    %917 = vmatprep.subr.mxu0 0.0
    %918 = vmatpush1.msra.mxu0 %v419
    %919 = vmatprep.subr.mxu0 0.0
    %920 = vmatpush1.msra.mxu0 %v418
    %921 = vmatprep.subr.mxu0 0.0
    %922 = vmatpush1.msra.mxu0 %v417
    %923 = vmatprep.subr.mxu0 0.0
    %924 = vmatpush2.msra.mxu0 0.0
    %925 = vmatprep.subr.mxu0 0.0
    %926 = vmatpush2.msra.mxu0 0.0
    %927 = vmatprep.subr.mxu0 0.0
    %928 = vmatpush2.msra.mxu0 0.0
    %929 = vmatprep.subr.mxu0 0.0
    %930 = vmatpush2.msra.mxu0 0.0
    %931 = vmatprep.subr.mxu0 0.0
    %932 = vmatpush2.msra.mxu0 %v444
    %933 = vmatprep.subr.mxu0 0.0
    %934 = vmatpush2.msra.mxu0 %v443
    %935 = vmatprep.subr.mxu0 0.0
    %936 = vmatpush2.msra.mxu0 %v442
    %937 = vmatprep.subr.mxu0 0.0
    %938 = vmatpush2.msra.mxu0 %v441
    %939 = vmatprep.subr.mxu0 0.0
    %940 = vmatpush2.msra.mxu0 %v440
    %941 = vmatprep.subr.mxu0 0.0
    %942 = vmatpush2.msra.mxu0 %v439
    %943 = vmatprep.subr.mxu0 0.0
    %944 = vmatpush2.msra.mxu0 %v438
    %945 = vmatprep.subr.mxu0 0.0
    %946 = vmatpush2.msra.mxu0 %v437
    %947 = vmatprep.subr.mxu0 0.0
    %948 = vmatpush2.msra.mxu0 %v436
    %949 = vmatprep.subr.mxu0 0.0
    %950 = vmatpush2.msra.mxu0 %v435
    %951 = vmatprep.subr.mxu0 0.0
    %952 = vmatpush2.msra.mxu0 %v434
    %953 = vmatprep.subr.mxu0 0.0
    %954 = vmatpush2.msra.mxu0 %v433
    %955 = vmatprep.mubr.f32.mxu0 %v889
    %956 = vmatmul.mubr.f32.gmra.mxu0 %v247
    %v957 = vpop.f32.mrf.mxu0
    %v958 = vadd.f32 0.0, %v957
    %v959 = vpop.f32.mrf.mxu0
    %960 = vdwg.mxu0
    %v961 = vadd.f32 %v887, %v958
    %v962 = vld [vmem:[%s5] sm:$0x1]
    %v964 = vlaneseq
    %v965 = vshrl.u32 %v964, 7
    %v966 = vsub.s32 0, %v965
    %v967 = vrot.slane %v962, %v966
    %v969 = vadd.f32 %v961, %v967
    %v970 = vmax.f32 %v969, 0.0
    %v971 = vld [vmem:[%s6] sm:$0xff]
    %v972 = vld [vmem:[%s6 + $0x8] sm:$0xff]
    %v973 = vld [vmem:[%s6 + $0x10] sm:$0xff]
    %v974 = vld [vmem:[%s6 + $0x18] sm:$0xff]
    %v975 = vld [vmem:[%s6 + $0x20] sm:$0xff]
    %v976 = vld [vmem:[%s6 + $0x28] sm:$0xff]
    %v977 = vld [vmem:[%s6 + $0x30] sm:$0xff]
    %v978 = vld [vmem:[%s6 + $0x38] sm:$0xff]
    %v979 = vld [vmem:[%s6 + $0x40] sm:$0xff]
    %v980 = vld [vmem:[%s6 + $0x48] sm:$0xff]
    %v981 = vld [vmem:[%s6 + $0x50] sm:$0xff]
    %v982 = vld [vmem:[%s6 + $0x58] sm:$0xff]
    %v983 = vld [vmem:[%s6 + $0x60] sm:$0xff]
    %v984 = vld [vmem:[%s6 + $0x68] sm:$0xff]
    %v985 = vld [vmem:[%s6 + $0x70] sm:$0xff]
    %v986 = vld [vmem:[%s6 + $0x78] sm:$0xff]
    %v987 = vld [vmem:[%s8] sm:$0x1]
    %v989 = vlaneseq
    %v990 = vshrl.u32 %v989, 7
    %v991 = vsub.s32 0, %v990
    %v992 = vrot.slane %v987, %v991
    %994 = vmatprep.subr.mxu0 0.0
    %995 = vmatpush1.msra.mxu0 %v986
    %996 = vmatprep.subr.mxu0 0.0
    %997 = vmatpush1.msra.mxu0 %v985
    %998 = vmatprep.subr.mxu0 0.0
    %999 = vmatpush1.msra.mxu0 %v984
    %1000 = vmatprep.subr.mxu0 0.0
    %1001 = vmatpush1.msra.mxu0 %v983
    %1002 = vmatprep.subr.mxu0 0.0
    %1003 = vmatpush1.msra.mxu0 %v982
    %1004 = vmatprep.subr.mxu0 0.0
    %1005 = vmatpush1.msra.mxu0 %v981
    %1006 = vmatprep.subr.mxu0 0.0
    %1007 = vmatpush1.msra.mxu0 %v980
    %1008 = vmatprep.subr.mxu0 0.0
    %1009 = vmatpush1.msra.mxu0 %v979
    %1010 = vmatprep.subr.mxu0 0.0
    %1011 = vmatpush1.msra.mxu0 %v978
    %1012 = vmatprep.subr.mxu0 0.0
    %1013 = vmatpush1.msra.mxu0 %v977
    %1014 = vmatprep.subr.mxu0 0.0
    %1015 = vmatpush1.msra.mxu0 %v976
    %1016 = vmatprep.subr.mxu0 0.0
    %1017 = vmatpush1.msra.mxu0 %v975
    %1018 = vmatprep.subr.mxu0 0.0
    %1019 = vmatpush1.msra.mxu0 %v974
    %1020 = vmatprep.subr.mxu0 0.0
    %1021 = vmatpush1.msra.mxu0 %v973
    %1022 = vmatprep.subr.mxu0 0.0
    %1023 = vmatpush1.msra.mxu0 %v972
    %1024 = vmatprep.subr.mxu0 0.0
    %1025 = vmatpush1.msra.mxu0 %v971
    %1026 = vmatprep.subr.mxu0 0.0
    %1027 = vmatpush2.msra.mxu0 0.0
    %1028 = vmatprep.subr.mxu0 0.0
    %1029 = vmatpush2.msra.mxu0 0.0
    %1030 = vmatprep.subr.mxu0 0.0
    %1031 = vmatpush2.msra.mxu0 0.0
    %1032 = vmatprep.subr.mxu0 0.0
    %1033 = vmatpush2.msra.mxu0 0.0
    %1034 = vmatprep.subr.mxu0 0.0
    %1035 = vmatpush2.msra.mxu0 0.0
    %1036 = vmatprep.subr.mxu0 0.0
    %1037 = vmatpush2.msra.mxu0 0.0
    %1038 = vmatprep.subr.mxu0 0.0
    %1039 = vmatpush2.msra.mxu0 0.0
    %1040 = vmatprep.subr.mxu0 0.0
    %1041 = vmatpush2.msra.mxu0 0.0
    %1042 = vmatprep.subr.mxu0 0.0
    %1043 = vmatpush2.msra.mxu0 0.0
    %1044 = vmatprep.subr.mxu0 0.0
    %1045 = vmatpush2.msra.mxu0 0.0
    %1046 = vmatprep.subr.mxu0 0.0
    %1047 = vmatpush2.msra.mxu0 0.0
    %1048 = vmatprep.subr.mxu0 0.0
    %1049 = vmatpush2.msra.mxu0 0.0
    %1050 = vmatprep.subr.mxu0 0.0
    %1051 = vmatpush2.msra.mxu0 0.0
    %1052 = vmatprep.subr.mxu0 0.0
    %1053 = vmatpush2.msra.mxu0 0.0
    %1054 = vmatprep.subr.mxu0 0.0
    %1055 = vmatpush2.msra.mxu0 0.0
    %1056 = vmatprep.subr.mxu0 0.0
    %1057 = vmatpush2.msra.mxu0 0.0
    %1058 = vmatprep.mubr.f32.mxu0 0.0
    %1059 = vmatmul.mubr.f32.gmra.mxu0 %v970
    %v1060 = vpop.f32.mrf.mxu0
    %v1061 = vadd.f32 %v992, %v1060
    %v1062 = vpop.f32.mrf.mxu0
    %1063 = vdwg.mxu0
    %v1064 = vld [vmem:[%s1] sm:$0xff]
    %v1065 = vld [vmem:[%s7] sm:$0x3f]
    %1067 = vset.pattern.permute.xlu0 0
    %1068 = vperm.xlu0 %1067, %v1064
    %v1069 = vpop.permute.xlu0 %1068
    %v1071 = vlaneseq
    %v1072 = vshrl.u32 %v1071, 7
    %v1073 = vsub.s32 0, %v1072
    %v1074 = vrot.slane %v1065, %v1073
    %v1075 = vmul.f32 %v1069, %v1074
    %v1076 = vadd.f32 %v1061, %v1075
    %1077 = vset.pattern.permute.xlu0 1
    %1078 = vperm.xlu0 %1077, %v1064
    %v1079 = vpop.permute.xlu0 %1078
    %v1081 = vlaneseq
    %v1082 = vshrl.u32 %v1081, 7
    %v1083 = vsub.s32 1, %v1082
    %v1084 = vrot.slane %v1065, %v1083
    %v1085 = vmul.f32 %v1079, %v1084
    %v1086 = vadd.f32 %v1076, %v1085
    %1087 = vset.pattern.permute.xlu0 2
    %1088 = vperm.xlu0 %1087, %v1064
    %v1089 = vpop.permute.xlu0 %1088
    %v1091 = vlaneseq
    %v1092 = vshrl.u32 %v1091, 7
    %v1093 = vsub.s32 2, %v1092
    %v1094 = vrot.slane %v1065, %v1093
    %v1095 = vmul.f32 %v1089, %v1094
    %v1096 = vadd.f32 %v1086, %v1095
    %1097 = vset.pattern.permute.xlu0 3
    %1098 = vperm.xlu0 %1097, %v1064
    %v1099 = vpop.permute.xlu0 %1098
    %v1101 = vlaneseq
    %v1102 = vshrl.u32 %v1101, 7
    %v1103 = vsub.s32 3, %v1102
    %v1104 = vrot.slane %v1065, %v1103
    %v1105 = vmul.f32 %v1099, %v1104
    %v1106 = vadd.f32 %v1096, %v1105
    %1107 = vset.pattern.permute.xlu0 4
    %1108 = vperm.xlu0 %1107, %v1064
    %v1109 = vpop.permute.xlu0 %1108
    %v1111 = vlaneseq
    %v1112 = vshrl.u32 %v1111, 7
    %v1113 = vsub.s32 4, %v1112
    %v1114 = vrot.slane %v1065, %v1113
    %v1115 = vmul.f32 %v1109, %v1114
    %v1116 = vadd.f32 %v1106, %v1115
    %1117 = vset.pattern.permute.xlu0 5
    %1118 = vperm.xlu0 %1117, %v1064
    %v1119 = vpop.permute.xlu0 %1118
    %v1121 = vlaneseq
    %v1122 = vshrl.u32 %v1121, 7
    %v1123 = vsub.s32 5, %v1122
    %v1124 = vrot.slane %v1065, %v1123
    %v1125 = vmul.f32 %v1119, %v1124
    %v1126 = vadd.f32 %v1116, %v1125
    %v1127 = vmax.f32 %v1126, 0.0
    %v1128 = vld [vmem:[%s9] sm:$0xff]
    %v1129 = vld [vmem:[%s9 + $0x8] sm:$0xff]
    %v1130 = vld [vmem:[%s9 + $0x10] sm:$0xff]
    %v1131 = vld [vmem:[%s9 + $0x18] sm:$0xff]
    %v1132 = vld [vmem:[%s9 + $0x20] sm:$0xff]
    %v1133 = vld [vmem:[%s9 + $0x28] sm:$0xff]
    %v1134 = vld [vmem:[%s9 + $0x30] sm:$0xff]
    %v1135 = vld [vmem:[%s9 + $0x38] sm:$0xff]
    %v1136 = vld [vmem:[%s10] sm:$0x1]
    %v1138 = vlaneseq
    %v1139 = vshrl.u32 %v1138, 7
    %v1140 = vsub.s32 0, %v1139
    %v1141 = vrot.slane %v1136, %v1140
    %vm1143 = vcmask 523264
    %v1145 = vsel %vm1143, %v1127, 0
    %1147 = vmatprep.subr.mxu0 0.0
    %1148 = vmatpush1.msra.mxu0 0.0
    %1149 = vmatprep.subr.mxu0 0.0
    %1150 = vmatpush1.msra.mxu0 0.0
    %1151 = vmatprep.subr.mxu0 0.0
    %1152 = vmatpush1.msra.mxu0 0.0
    %1153 = vmatprep.subr.mxu0 0.0
    %1154 = vmatpush1.msra.mxu0 0.0
    %1155 = vmatprep.subr.mxu0 0.0
    %1156 = vmatpush1.msra.mxu0 0.0
    %1157 = vmatprep.subr.mxu0 0.0
    %1158 = vmatpush1.msra.mxu0 0.0
    %1159 = vmatprep.subr.mxu0 0.0
    %1160 = vmatpush1.msra.mxu0 0.0
    %1161 = vmatprep.subr.mxu0 0.0
    %1162 = vmatpush1.msra.mxu0 0.0
    %1163 = vmatprep.subr.mxu0 0.0
    %1164 = vmatpush1.msra.mxu0 %v1135
    %1165 = vmatprep.subr.mxu0 0.0
    %1166 = vmatpush1.msra.mxu0 %v1134
    %1167 = vmatprep.subr.mxu0 0.0
    %1168 = vmatpush1.msra.mxu0 %v1133
    %1169 = vmatprep.subr.mxu0 0.0
    %1170 = vmatpush1.msra.mxu0 %v1132
    %1171 = vmatprep.subr.mxu0 0.0
    %1172 = vmatpush1.msra.mxu0 %v1131
    %1173 = vmatprep.subr.mxu0 0.0
    %1174 = vmatpush1.msra.mxu0 %v1130
    %1175 = vmatprep.subr.mxu0 0.0
    %1176 = vmatpush1.msra.mxu0 %v1129
    %1177 = vmatprep.subr.mxu0 0.0
    %1178 = vmatpush1.msra.mxu0 %v1128
    %1179 = vmatprep.subr.mxu0 0.0
    %1180 = vmatpush2.msra.mxu0 0.0
    %1181 = vmatprep.subr.mxu0 0.0
    %1182 = vmatpush2.msra.mxu0 0.0
    %1183 = vmatprep.subr.mxu0 0.0
    %1184 = vmatpush2.msra.mxu0 0.0
    %1185 = vmatprep.subr.mxu0 0.0
    %1186 = vmatpush2.msra.mxu0 0.0
    %1187 = vmatprep.subr.mxu0 0.0
    %1188 = vmatpush2.msra.mxu0 0.0
    %1189 = vmatprep.subr.mxu0 0.0
    %1190 = vmatpush2.msra.mxu0 0.0
    %1191 = vmatprep.subr.mxu0 0.0
    %1192 = vmatpush2.msra.mxu0 0.0
    %1193 = vmatprep.subr.mxu0 0.0
    %1194 = vmatpush2.msra.mxu0 0.0
    %1195 = vmatprep.subr.mxu0 0.0
    %1196 = vmatpush2.msra.mxu0 0.0
    %1197 = vmatprep.subr.mxu0 0.0
    %1198 = vmatpush2.msra.mxu0 0.0
    %1199 = vmatprep.subr.mxu0 0.0
    %1200 = vmatpush2.msra.mxu0 0.0
    %1201 = vmatprep.subr.mxu0 0.0
    %1202 = vmatpush2.msra.mxu0 0.0
    %1203 = vmatprep.subr.mxu0 0.0
    %1204 = vmatpush2.msra.mxu0 0.0
    %1205 = vmatprep.subr.mxu0 0.0
    %1206 = vmatpush2.msra.mxu0 0.0
    %1207 = vmatprep.subr.mxu0 0.0
    %1208 = vmatpush2.msra.mxu0 0.0
    %1209 = vmatprep.subr.mxu0 0.0
    %1210 = vmatpush2.msra.mxu0 0.0
    %1211 = vmatprep.mubr.f32.mxu0 0.0
    %1212 = vmatmul.mubr.f32.gmra.mxu0 %v1145
    %v1213 = vpop.f32.mrf.mxu0
    %v1214 = vadd.f32 %v1141, %v1213
    %v1215 = vpop.f32.mrf.mxu0
    %1216 = vdwg.mxu0
    %vm1217 = vcmask 64512
    %1218 = vst.msk [vmem:[%s11] sm:$0xff] %vm1217, %v1214
    // Predicated region
    $region50: #{network_forward.1} parent=1 // pred_check
      _
    $region51: #{network_forward.1} parent=1 // pred_check_branch
      %1220 = sbr.rel (0) target = $region53
    $region52: #{network_forward.1} parent=1 // pred_region
      _
    $region53: #{network_forward.1} parent=1 // pred_fallthru
      _
    // Predicated region
    $region54: #{network_forward.1} parent=1 // pred_check
      _
    $region55: #{network_forward.1} parent=1 // pred_check_branch
      %1222 = sbr.rel (0) target = $region57
    $region56: #{network_forward.1} parent=1 // pred_region
      _
    $region57: #{network_forward.1} parent=1 // pred_fallthru
      _
    %1223 = vsyncpa [#allocation3], 1

</llo_original>
